<compile_context>
chip_gen: v5e
topology: v5e:2x2
jax: 0.10.0
libtpu: 0.0.40
codegen_flags: <defaults>
</compile_context>

<pallas_src>
import jax
import jax.numpy as jnp
from jax import lax
from jax.experimental import pallas as pl
from jax.experimental.pallas import tpu as pltpu


def lstm_kernel(tok_ref, emb_ref, wih_ref, whh_ref, b_ref, wo_ref, bo_ref,
                out_ref, x_vmem, xg_vmem, hall_vmem):
    T, Bb, OP = out_ref.shape
    H = whh_ref.shape[0]
    row0 = pl.program_id(0) * Bb          # first sentence of this batch block

    # --- 1) In-kernel embedding gather (VMEM table, dynamic row reads).
    #        Time-major scratch layout: row = t*Bb + b, so each step's Bb rows
    #        are contiguous for the recurrence.
    for t in range(T):
        for bb in range(Bb):
            tok = tok_ref[row0 + bb, t]                       # scalar from SMEM
            x_vmem[pl.ds(t * Bb + bb, 1), :] = emb_ref[pl.ds(tok, 1), :]

    # --- 2) Hoisted input-side matmul: one (T*Bb,E)x(E,4H) MXU pass, spilled
    #        to VMEM scratch so the unrolled loop reads row-slices.
    xg_vmem[...] = jnp.dot(x_vmem[...], wih_ref[...],
                           preferred_element_type=jnp.float32) + b_ref[...]

    # --- 3) Recurrence on the whole (Bb, H) state block (fully unrolled, static T).
    whh = whh_ref[...]                                        # read RHS once
    h = jnp.zeros((Bb, H), jnp.float32)
    c = jnp.zeros((Bb, H), jnp.float32)
    for t in range(T):
        gates = xg_vmem[pl.ds(t * Bb, Bb), :] + jnp.dot(
            h, whh, preferred_element_type=jnp.float32)       # (Bb, 4H)
        sg = jax.nn.sigmoid(gates)                            # full-vreg sigmoid
        i_g = sg[:, 0 * H:1 * H]
        f_g = sg[:, 1 * H:2 * H]
        g_g = jnp.tanh(gates[:, 2 * H:3 * H])                 # tanh only on g slice
        o_g = sg[:, 3 * H:4 * H]
        c = f_g * c + i_g * g_g
        h = o_g * jnp.tanh(c)
        hall_vmem[pl.ds(t * Bb, Bb), :] = h                   # spill h_t to scratch

    # --- 4) Post-loop projection + numerically-stable log_softmax; one
    #        lane-dense (T, Bb, OP) store.
    tags = jnp.dot(hall_vmem[...], wo_ref[...],
                   preferred_element_type=jnp.float32) + bo_ref[...]   # (T*Bb, OP)
    shifted = tags - jnp.max(tags, axis=-1, keepdims=True)
    lse = jnp.log(jnp.sum(jnp.exp(shifted), axis=-1, keepdims=True))
    out_ref[...] = (shifted - lse).reshape(T, Bb, OP)


def lstm_model_forward_batched(sentences, emb, wih_t, whh_t, b, wout_t, b_out,
                               *, block_b=8):
    """sentences (B,T) i32; emb (V,E); wih_t (E,4H); whh_t (H,4H); b (1,4H);
    wout_t (H,O); b_out (1,O)  ->  (B,T,O) per-sentence log-softmax scores."""
    B, T = sentences.shape
    E = emb.shape[1]
    H = whh_t.shape[0]
    O = wout_t.shape[1]
    OP = max(128, -(-O // 128) * 128)       # lane-dense padded output width
    Bb = block_b
    Bp = -(-B // Bb) * Bb                   # batch padded to a multiple of Bb

    # Layout plumbing (wrapper side only).
    toks = jnp.zeros((Bp, T), jnp.int32).at[:B, :].set(sentences.astype(jnp.int32))
    wo_pad = jnp.zeros((H, OP), jnp.float32).at[:, :O].set(wout_t)
    bo_pad = jnp.full((1, OP), -1e30, dtype=jnp.float32).at[:, :O].set(b_out)

    out_padded = pl.pallas_call(
        lstm_kernel,
        out_shape=jax.ShapeDtypeStruct((T, Bp, OP), jnp.float32),
        grid=(Bp // Bb,),
        in_specs=[
            pl.BlockSpec(memory_space=pltpu.MemorySpace.SMEM),   # token ids (full)
            pl.BlockSpec(memory_space=pltpu.MemorySpace.VMEM),   # embedding table
            pl.BlockSpec(memory_space=pltpu.MemorySpace.VMEM),   # W_ih^T
            pl.BlockSpec(memory_space=pltpu.MemorySpace.VMEM),   # W_hh^T
            pl.BlockSpec(memory_space=pltpu.MemorySpace.VMEM),   # b (1, 4H)
            pl.BlockSpec(memory_space=pltpu.MemorySpace.VMEM),   # W_out^T (padded)
            pl.BlockSpec(memory_space=pltpu.MemorySpace.VMEM),   # b_out (padded)
        ],
        out_specs=pl.BlockSpec((T, Bb, OP), lambda bi: (0, bi, 0)),
        scratch_shapes=[
            pltpu.VMEM((T * Bb, E), jnp.float32),        # gathered embedding rows
            pltpu.VMEM((T * Bb, 4 * H), jnp.float32),    # hoisted input gates
            pltpu.VMEM((T * Bb, H), jnp.float32),        # all h_t
        ],
        # Batch-block axis is embarrassingly parallel -> shards across the two
        # v7x TensorCores (no-op on single-TC v5e/v6e).
        compiler_params=pltpu.CompilerParams(
            dimension_semantics=("parallel",)),
        # NOTE: at scaled-up H/E/B (esp. on v7x's 64 MiB VMEM) set
        # vmem_limit_bytes explicitly and cast weights/activations to bf16 for
        # the MXU matmuls; not needed at this toy config.
    )(toks, emb, wih_t, whh_t, b, wo_pad, bo_pad)

    # (T, Bp, OP) time-major -> (B, T, O)
    return jnp.transpose(out_padded, (1, 0, 2))[:B, :, :O]


def lstm_model_forward(sentence, emb, wih_t, whh_t, b, wout_t, b_out):
    """Single-sentence interface matching LSTMModel.forward: (T,) -> (T, O)."""
    return lstm_model_forward_batched(sentence[None, :], emb, wih_t, whh_t, b,
                                      wout_t, b_out)[0]


def reference_forward(sentence, emb, wih_t, whh_t, b, wout_t, b_out):
    """Pure-JAX reference with identical semantics (for correctness check)."""
    H = whh_t.shape[0]
    x_seq = emb[sentence]                                     # (T, E)

    def cell(carry, x):
        h, c = carry
        gates = x[None, :] @ wih_t + h @ whh_t + b            # (1, 4H)
        i_g = jax.nn.sigmoid(gates[:, 0 * H:1 * H])
        f_g = jax.nn.sigmoid(gates[:, 1 * H:2 * H])
        g_g = jnp.tanh(gates[:, 2 * H:3 * H])
        o_g = jax.nn.sigmoid(gates[:, 3 * H:4 * H])
        c_new = f_g * c + i_g * g_g
        h_new = o_g * jnp.tanh(c_new)
        return (h_new, c_new), h_new[0]

    h0 = jnp.zeros((1, H), jnp.float32)
    c0 = jnp.zeros((1, H), jnp.float32)
    _, hs = lax.scan(cell, (h0, c0), x_seq)                   # (T, H)
    tags = hs @ wout_t + b_out                                # (T, O)
    return jax.nn.log_softmax(tags, axis=1)


if __name__ == "__main__":
    # Small, deterministic configuration consistent with the module's forward.
    embedding_dim, hidden_dim, vocab_size, output_size = 128, 32, 50, 8
    T, B = 8, 2  # sentence length, number of sentences batched into one call

    key = jax.random.PRNGKey(0)
    k_tok, k_emb, k_wih, k_whh, k_bih, k_bhh, k_wo, k_bo = jax.random.split(key, 8)

    sentences = jax.random.randint(k_tok, (B, T), 0, vocab_size, dtype=jnp.int32)

    # nn.Embedding default: N(0, 1)
    emb = jax.random.normal(k_emb, (vocab_size, embedding_dim), dtype=jnp.float32)

    # nn.LSTM default: U(-1/sqrt(H), 1/sqrt(H)); gate order [i, f, g, o]
    s = 1.0 / jnp.sqrt(jnp.float32(hidden_dim))
    wih = jax.random.uniform(k_wih, (4 * hidden_dim, embedding_dim), jnp.float32, -s, s)
    whh = jax.random.uniform(k_whh, (4 * hidden_dim, hidden_dim), jnp.float32, -s, s)
    b_ih = jax.random.uniform(k_bih, (4 * hidden_dim,), jnp.float32, -s, s)
    b_hh = jax.random.uniform(k_bhh, (4 * hidden_dim,), jnp.float32, -s, s)

    # nn.Linear default: U(-1/sqrt(fan_in), 1/sqrt(fan_in))
    so = 1.0 / jnp.sqrt(jnp.float32(hidden_dim))
    w_out = jax.random.uniform(k_wo, (output_size, hidden_dim), jnp.float32, -so, so)
    b_out = jax.random.uniform(k_bo, (output_size,), jnp.float32, -so, so)

    # Pre-transpose / pre-combine for the kernel (glue).
    wih_t = wih.T                                   # (E, 4H)
    whh_t = whh.T                                   # (H, 4H)
    b = (b_ih + b_hh)[None, :]                      # (1, 4H)
    wout_t = w_out.T                                # (H, O)
    bo = b_out[None, :]                             # (1, O)

    # Batched kernel call (B sentences in one pallas_call).
    out_b = lstm_model_forward_batched(sentences, emb, wih_t, whh_t, b, wout_t, bo)
    out_b = jax.block_until_ready(out_b)
    assert out_b.shape == (B, T, output_size)
    for bi in range(B):
        ref = reference_forward(sentences[bi], emb, wih_t, whh_t, b, wout_t, bo)
        assert jnp.allclose(out_b[bi], ref, atol=1e-4, rtol=1e-4), \
            f"mismatch vs JAX reference (sentence {bi})"

    # Single-sentence interface, identical to LSTMModel.forward semantics.
    out_1 = lstm_model_forward(sentences[0], emb, wih_t, whh_t, b, wout_t, bo)
    out_1 = jax.block_until_ready(out_1)
    assert out_1.shape == (T, output_size)
    assert jnp.allclose(out_1, out_b[0], atol=1e-5, rtol=1e-5)

    print("KERNEL_OK")
</pallas_src>

<mosaic_0001>
module attributes {stable_mosaic.version = 11 : i64} {
  func.func @lstm_kernel(%arg0: i32, %arg1: memref<8x8xi32, #tpu.memory_space<smem>>, %arg2: memref<50x128xf32, #tpu.memory_space<vmem>>, %arg3: memref<128x128xf32, #tpu.memory_space<vmem>>, %arg4: memref<32x128xf32, #tpu.memory_space<vmem>>, %arg5: memref<1x128xf32, #tpu.memory_space<vmem>>, %arg6: memref<32x128xf32, #tpu.memory_space<vmem>>, %arg7: memref<1x128xf32, #tpu.memory_space<vmem>>, %arg8: memref<8x8x128xf32, #tpu.memory_space<vmem>>, %arg9: memref<64x128xf32, #tpu.memory_space<vmem>>, %arg10: memref<64x128xf32, #tpu.memory_space<vmem>>, %arg11: memref<64x32xf32, #tpu.memory_space<vmem>>) attributes {dimension_semantics = [#tpu.dimension_semantics<parallel>], iteration_bounds = array<i64: 1>, scalar_prefetch = 0 : i64, scratch_operands = 3 : i64, tpu.core_type = #tpu.core_type<tc>, window_params = [{transform_indices = @transform_0, window_bounds = array<i64: 8, 8>}, {pipeline_mode = #tpu.pipeline_mode<synchronous>, transform_indices = @transform_1, window_bounds = array<i64: 50, 128>}, {pipeline_mode = #tpu.pipeline_mode<synchronous>, transform_indices = @transform_2, window_bounds = array<i64: 128, 128>}, {pipeline_mode = #tpu.pipeline_mode<synchronous>, transform_indices = @transform_3, window_bounds = array<i64: 32, 128>}, {pipeline_mode = #tpu.pipeline_mode<synchronous>, transform_indices = @transform_4, window_bounds = array<i64: 1, 128>}, {pipeline_mode = #tpu.pipeline_mode<synchronous>, transform_indices = @transform_5, window_bounds = array<i64: 32, 128>}, {pipeline_mode = #tpu.pipeline_mode<synchronous>, transform_indices = @transform_6, window_bounds = array<i64: 1, 128>}, {transform_indices = @transform_7, window_bounds = array<i64: 8, 8, 128>}]} {
    %c8_i32 = arith.constant 8 : i32
    %0 = arith.muli %arg0, %c8_i32 : i32
    %c0_i32 = arith.constant 0 : i32
    %1 = arith.addi %0, %c0_i32 : i32
    %2 = arith.index_cast %1 : i32 to index
    %c0 = arith.constant 0 : index
    %3 = memref.load %arg1[%2, %c0] : memref<8x8xi32, #tpu.memory_space<smem>>
    %4 = arith.index_cast %3 : i32 to index
    %c0_0 = arith.constant 0 : index
    %5 = vector.load %arg2[%4, %c0_0] : memref<50x128xf32, #tpu.memory_space<vmem>>, vector<1x128xf32>
    %c0_1 = arith.constant 0 : index
    %c0_2 = arith.constant 0 : index
    %6 = vector.load %arg9[%c0_1, %c0_2] : memref<64x128xf32, #tpu.memory_space<vmem>>, vector<1x128xf32>
    tpu.vector_store %arg9[%c0_1, %c0_2], %5 {strides = array<i32>} : memref<64x128xf32, #tpu.memory_space<vmem>>, vector<1x128xf32>,
    %c1_i32 = arith.constant 1 : i32
    %7 = arith.addi %0, %c1_i32 : i32
    %8 = arith.index_cast %7 : i32 to index
    %c0_3 = arith.constant 0 : index
    %9 = memref.load %arg1[%8, %c0_3] : memref<8x8xi32, #tpu.memory_space<smem>>
    %10 = arith.index_cast %9 : i32 to index
    %c0_4 = arith.constant 0 : index
    %11 = vector.load %arg2[%10, %c0_4] : memref<50x128xf32, #tpu.memory_space<vmem>>, vector<1x128xf32>
    %c1 = arith.constant 1 : index
    %c0_5 = arith.constant 0 : index
    %12 = vector.load %arg9[%c1, %c0_5] : memref<64x128xf32, #tpu.memory_space<vmem>>, vector<1x128xf32>
    tpu.vector_store %arg9[%c1, %c0_5], %11 {strides = array<i32>} : memref<64x128xf32, #tpu.memory_space<vmem>>, vector<1x128xf32>,
    %c2_i32 = arith.constant 2 : i32
    %13 = arith.addi %0, %c2_i32 : i32
    %14 = arith.index_cast %13 : i32 to index
    %c0_6 = arith.constant 0 : index
    %15 = memref.load %arg1[%14, %c0_6] : memref<8x8xi32, #tpu.memory_space<smem>>
    %16 = arith.index_cast %15 : i32 to index
    %c0_7 = arith.constant 0 : index
    %17 = vector.load %arg2[%16, %c0_7] : memref<50x128xf32, #tpu.memory_space<vmem>>, vector<1x128xf32>
    %c2 = arith.constant 2 : index
    %c0_8 = arith.constant 0 : index
    %18 = vector.load %arg9[%c2, %c0_8] : memref<64x128xf32, #tpu.memory_space<vmem>>, vector<1x128xf32>
    tpu.vector_store %arg9[%c2, %c0_8], %17 {strides = array<i32>} : memref<64x128xf32, #tpu.memory_space<vmem>>, vector<1x128xf32>,
    %c3_i32 = arith.constant 3 : i32
    %19 = arith.addi %0, %c3_i32 : i32
    %20 = arith.index_cast %19 : i32 to index
    %c0_9 = arith.constant 0 : index
    %21 = memref.load %arg1[%20, %c0_9] : memref<8x8xi32, #tpu.memory_space<smem>>
    %22 = arith.index_cast %21 : i32 to index
    %c0_10 = arith.constant 0 : index
    %23 = vector.load %arg2[%22, %c0_10] : memref<50x128xf32, #tpu.memory_space<vmem>>, vector<1x128xf32>
    %c3 = arith.constant 3 : index
    %c0_11 = arith.constant 0 : index
    %24 = vector.load %arg9[%c3, %c0_11] : memref<64x128xf32, #tpu.memory_space<vmem>>, vector<1x128xf32>
    tpu.vector_store %arg9[%c3, %c0_11], %23 {strides = array<i32>} : memref<64x128xf32, #tpu.memory_space<vmem>>, vector<1x128xf32>,
    %c4_i32 = arith.constant 4 : i32
    %25 = arith.addi %0, %c4_i32 : i32
    %26 = arith.index_cast %25 : i32 to index
    %c0_12 = arith.constant 0 : index
    %27 = memref.load %arg1[%26, %c0_12] : memref<8x8xi32, #tpu.memory_space<smem>>
    %28 = arith.index_cast %27 : i32 to index
    %c0_13 = arith.constant 0 : index
    %29 = vector.load %arg2[%28, %c0_13] : memref<50x128xf32, #tpu.memory_space<vmem>>, vector<1x128xf32>
    %c4 = arith.constant 4 : index
    %c0_14 = arith.constant 0 : index
    %30 = vector.load %arg9[%c4, %c0_14] : memref<64x128xf32, #tpu.memory_space<vmem>>, vector<1x128xf32>
    tpu.vector_store %arg9[%c4, %c0_14], %29 {strides = array<i32>} : memref<64x128xf32, #tpu.memory_space<vmem>>, vector<1x128xf32>,
    %c5_i32 = arith.constant 5 : i32
    %31 = arith.addi %0, %c5_i32 : i32
    %32 = arith.index_cast %31 : i32 to index
    %c0_15 = arith.constant 0 : index
    %33 = memref.load %arg1[%32, %c0_15] : memref<8x8xi32, #tpu.memory_space<smem>>
    %34 = arith.index_cast %33 : i32 to index
    %c0_16 = arith.constant 0 : index
    %35 = vector.load %arg2[%34, %c0_16] : memref<50x128xf32, #tpu.memory_space<vmem>>, vector<1x128xf32>
    %c5 = arith.constant 5 : index
    %c0_17 = arith.constant 0 : index
    %36 = vector.load %arg9[%c5, %c0_17] : memref<64x128xf32, #tpu.memory_space<vmem>>, vector<1x128xf32>
    tpu.vector_store %arg9[%c5, %c0_17], %35 {strides = array<i32>} : memref<64x128xf32, #tpu.memory_space<vmem>>, vector<1x128xf32>,
    %c6_i32 = arith.constant 6 : i32
    %37 = arith.addi %0, %c6_i32 : i32
    %38 = arith.index_cast %37 : i32 to index
    %c0_18 = arith.constant 0 : index
    %39 = memref.load %arg1[%38, %c0_18] : memref<8x8xi32, #tpu.memory_space<smem>>
    %40 = arith.index_cast %39 : i32 to index
    %c0_19 = arith.constant 0 : index
    %41 = vector.load %arg2[%40, %c0_19] : memref<50x128xf32, #tpu.memory_space<vmem>>, vector<1x128xf32>
    %c6 = arith.constant 6 : index
    %c0_20 = arith.constant 0 : index
    %42 = vector.load %arg9[%c6, %c0_20] : memref<64x128xf32, #tpu.memory_space<vmem>>, vector<1x128xf32>
    tpu.vector_store %arg9[%c6, %c0_20], %41 {strides = array<i32>} : memref<64x128xf32, #tpu.memory_space<vmem>>, vector<1x128xf32>,
    %c7_i32 = arith.constant 7 : i32
    %43 = arith.addi %0, %c7_i32 : i32
    %44 = arith.index_cast %43 : i32 to index
    %c0_21 = arith.constant 0 : index
    %45 = memref.load %arg1[%44, %c0_21] : memref<8x8xi32, #tpu.memory_space<smem>>
    %46 = arith.index_cast %45 : i32 to index
    %c0_22 = arith.constant 0 : index
    %47 = vector.load %arg2[%46, %c0_22] : memref<50x128xf32, #tpu.memory_space<vmem>>, vector<1x128xf32>
    %c7 = arith.constant 7 : index
    %c0_23 = arith.constant 0 : index
    %48 = vector.load %arg9[%c7, %c0_23] : memref<64x128xf32, #tpu.memory_space<vmem>>, vector<1x128xf32>
    tpu.vector_store %arg9[%c7, %c0_23], %47 {strides = array<i32>} : memref<64x128xf32, #tpu.memory_space<vmem>>, vector<1x128xf32>,
    %c0_i32_24 = arith.constant 0 : i32
    %49 = arith.addi %0, %c0_i32_24 : i32
    %50 = arith.index_cast %49 : i32 to index
    %c1_25 = arith.constant 1 : index
    %51 = memref.load %arg1[%50, %c1_25] : memref<8x8xi32, #tpu.memory_space<smem>>
    %52 = arith.index_cast %51 : i32 to index
    %c0_26 = arith.constant 0 : index
    %53 = vector.load %arg2[%52, %c0_26] : memref<50x128xf32, #tpu.memory_space<vmem>>, vector<1x128xf32>
    %c8 = arith.constant 8 : index
    %c0_27 = arith.constant 0 : index
    %54 = vector.load %arg9[%c8, %c0_27] : memref<64x128xf32, #tpu.memory_space<vmem>>, vector<1x128xf32>
    tpu.vector_store %arg9[%c8, %c0_27], %53 {strides = array<i32>} : memref<64x128xf32, #tpu.memory_space<vmem>>, vector<1x128xf32>,
    %c1_i32_28 = arith.constant 1 : i32
    %55 = arith.addi %0, %c1_i32_28 : i32
    %56 = arith.index_cast %55 : i32 to index
    %c1_29 = arith.constant 1 : index
    %57 = memref.load %arg1[%56, %c1_29] : memref<8x8xi32, #tpu.memory_space<smem>>
    %58 = arith.index_cast %57 : i32 to index
    %c0_30 = arith.constant 0 : index
    %59 = vector.load %arg2[%58, %c0_30] : memref<50x128xf32, #tpu.memory_space<vmem>>, vector<1x128xf32>
    %c9 = arith.constant 9 : index
    %c0_31 = arith.constant 0 : index
    %60 = vector.load %arg9[%c9, %c0_31] : memref<64x128xf32, #tpu.memory_space<vmem>>, vector<1x128xf32>
    tpu.vector_store %arg9[%c9, %c0_31], %59 {strides = array<i32>} : memref<64x128xf32, #tpu.memory_space<vmem>>, vector<1x128xf32>,
    %c2_i32_32 = arith.constant 2 : i32
    %61 = arith.addi %0, %c2_i32_32 : i32
    %62 = arith.index_cast %61 : i32 to index
    %c1_33 = arith.constant 1 : index
    %63 = memref.load %arg1[%62, %c1_33] : memref<8x8xi32, #tpu.memory_space<smem>>
    %64 = arith.index_cast %63 : i32 to index
    %c0_34 = arith.constant 0 : index
    %65 = vector.load %arg2[%64, %c0_34] : memref<50x128xf32, #tpu.memory_space<vmem>>, vector<1x128xf32>
    %c10 = arith.constant 10 : index
    %c0_35 = arith.constant 0 : index
    %66 = vector.load %arg9[%c10, %c0_35] : memref<64x128xf32, #tpu.memory_space<vmem>>, vector<1x128xf32>
    tpu.vector_store %arg9[%c10, %c0_35], %65 {strides = array<i32>} : memref<64x128xf32, #tpu.memory_space<vmem>>, vector<1x128xf32>,
    %c3_i32_36 = arith.constant 3 : i32
    %67 = arith.addi %0, %c3_i32_36 : i32
    %68 = arith.index_cast %67 : i32 to index
    %c1_37 = arith.constant 1 : index
    %69 = memref.load %arg1[%68, %c1_37] : memref<8x8xi32, #tpu.memory_space<smem>>
    %70 = arith.index_cast %69 : i32 to index
    %c0_38 = arith.constant 0 : index
    %71 = vector.load %arg2[%70, %c0_38] : memref<50x128xf32, #tpu.memory_space<vmem>>, vector<1x128xf32>
    %c11 = arith.constant 11 : index
    %c0_39 = arith.constant 0 : index
    %72 = vector.load %arg9[%c11, %c0_39] : memref<64x128xf32, #tpu.memory_space<vmem>>, vector<1x128xf32>
    tpu.vector_store %arg9[%c11, %c0_39], %71 {strides = array<i32>} : memref<64x128xf32, #tpu.memory_space<vmem>>, vector<1x128xf32>,
    %c4_i32_40 = arith.constant 4 : i32
    %73 = arith.addi %0, %c4_i32_40 : i32
    %74 = arith.index_cast %73 : i32 to index
    %c1_41 = arith.constant 1 : index
    %75 = memref.load %arg1[%74, %c1_41] : memref<8x8xi32, #tpu.memory_space<smem>>
    %76 = arith.index_cast %75 : i32 to index
    %c0_42 = arith.constant 0 : index
    %77 = vector.load %arg2[%76, %c0_42] : memref<50x128xf32, #tpu.memory_space<vmem>>, vector<1x128xf32>
    %c12 = arith.constant 12 : index
    %c0_43 = arith.constant 0 : index
    %78 = vector.load %arg9[%c12, %c0_43] : memref<64x128xf32, #tpu.memory_space<vmem>>, vector<1x128xf32>
    tpu.vector_store %arg9[%c12, %c0_43], %77 {strides = array<i32>} : memref<64x128xf32, #tpu.memory_space<vmem>>, vector<1x128xf32>,
    %c5_i32_44 = arith.constant 5 : i32
    %79 = arith.addi %0, %c5_i32_44 : i32
    %80 = arith.index_cast %79 : i32 to index
    %c1_45 = arith.constant 1 : index
    %81 = memref.load %arg1[%80, %c1_45] : memref<8x8xi32, #tpu.memory_space<smem>>
    %82 = arith.index_cast %81 : i32 to index
    %c0_46 = arith.constant 0 : index
    %83 = vector.load %arg2[%82, %c0_46] : memref<50x128xf32, #tpu.memory_space<vmem>>, vector<1x128xf32>
    %c13 = arith.constant 13 : index
    %c0_47 = arith.constant 0 : index
    %84 = vector.load %arg9[%c13, %c0_47] : memref<64x128xf32, #tpu.memory_space<vmem>>, vector<1x128xf32>
    tpu.vector_store %arg9[%c13, %c0_47], %83 {strides = array<i32>} : memref<64x128xf32, #tpu.memory_space<vmem>>, vector<1x128xf32>,
    %c6_i32_48 = arith.constant 6 : i32
    %85 = arith.addi %0, %c6_i32_48 : i32
    %86 = arith.index_cast %85 : i32 to index
    %c1_49 = arith.constant 1 : index
    %87 = memref.load %arg1[%86, %c1_49] : memref<8x8xi32, #tpu.memory_space<smem>>
    %88 = arith.index_cast %87 : i32 to index
    %c0_50 = arith.constant 0 : index
    %89 = vector.load %arg2[%88, %c0_50] : memref<50x128xf32, #tpu.memory_space<vmem>>, vector<1x128xf32>
    %c14 = arith.constant 14 : index
    %c0_51 = arith.constant 0 : index
    %90 = vector.load %arg9[%c14, %c0_51] : memref<64x128xf32, #tpu.memory_space<vmem>>, vector<1x128xf32>
    tpu.vector_store %arg9[%c14, %c0_51], %89 {strides = array<i32>} : memref<64x128xf32, #tpu.memory_space<vmem>>, vector<1x128xf32>,
    %c7_i32_52 = arith.constant 7 : i32
    %91 = arith.addi %0, %c7_i32_52 : i32
    %92 = arith.index_cast %91 : i32 to index
    %c1_53 = arith.constant 1 : index
    %93 = memref.load %arg1[%92, %c1_53] : memref<8x8xi32, #tpu.memory_space<smem>>
    %94 = arith.index_cast %93 : i32 to index
    %c0_54 = arith.constant 0 : index
    %95 = vector.load %arg2[%94, %c0_54] : memref<50x128xf32, #tpu.memory_space<vmem>>, vector<1x128xf32>
    %c15 = arith.constant 15 : index
    %c0_55 = arith.constant 0 : index
    %96 = vector.load %arg9[%c15, %c0_55] : memref<64x128xf32, #tpu.memory_space<vmem>>, vector<1x128xf32>
    tpu.vector_store %arg9[%c15, %c0_55], %95 {strides = array<i32>} : memref<64x128xf32, #tpu.memory_space<vmem>>, vector<1x128xf32>,
    %c0_i32_56 = arith.constant 0 : i32
    %97 = arith.addi %0, %c0_i32_56 : i32
    %98 = arith.index_cast %97 : i32 to index
    %c2_57 = arith.constant 2 : index
    %99 = memref.load %arg1[%98, %c2_57] : memref<8x8xi32, #tpu.memory_space<smem>>
    %100 = arith.index_cast %99 : i32 to index
    %c0_58 = arith.constant 0 : index
    %101 = vector.load %arg2[%100, %c0_58] : memref<50x128xf32, #tpu.memory_space<vmem>>, vector<1x128xf32>
    %c16 = arith.constant 16 : index
    %c0_59 = arith.constant 0 : index
    %102 = vector.load %arg9[%c16, %c0_59] : memref<64x128xf32, #tpu.memory_space<vmem>>, vector<1x128xf32>
    tpu.vector_store %arg9[%c16, %c0_59], %101 {strides = array<i32>} : memref<64x128xf32, #tpu.memory_space<vmem>>, vector<1x128xf32>,
    %c1_i32_60 = arith.constant 1 : i32
    %103 = arith.addi %0, %c1_i32_60 : i32
    %104 = arith.index_cast %103 : i32 to index
    %c2_61 = arith.constant 2 : index
    %105 = memref.load %arg1[%104, %c2_61] : memref<8x8xi32, #tpu.memory_space<smem>>
    %106 = arith.index_cast %105 : i32 to index
    %c0_62 = arith.constant 0 : index
    %107 = vector.load %arg2[%106, %c0_62] : memref<50x128xf32, #tpu.memory_space<vmem>>, vector<1x128xf32>
    %c17 = arith.constant 17 : index
    %c0_63 = arith.constant 0 : index
    %108 = vector.load %arg9[%c17, %c0_63] : memref<64x128xf32, #tpu.memory_space<vmem>>, vector<1x128xf32>
    tpu.vector_store %arg9[%c17, %c0_63], %107 {strides = array<i32>} : memref<64x128xf32, #tpu.memory_space<vmem>>, vector<1x128xf32>,
    %c2_i32_64 = arith.constant 2 : i32
    %109 = arith.addi %0, %c2_i32_64 : i32
    %110 = arith.index_cast %109 : i32 to index
    %c2_65 = arith.constant 2 : index
    %111 = memref.load %arg1[%110, %c2_65] : memref<8x8xi32, #tpu.memory_space<smem>>
    %112 = arith.index_cast %111 : i32 to index
    %c0_66 = arith.constant 0 : index
    %113 = vector.load %arg2[%112, %c0_66] : memref<50x128xf32, #tpu.memory_space<vmem>>, vector<1x128xf32>
    %c18 = arith.constant 18 : index
    %c0_67 = arith.constant 0 : index
    %114 = vector.load %arg9[%c18, %c0_67] : memref<64x128xf32, #tpu.memory_space<vmem>>, vector<1x128xf32>
    tpu.vector_store %arg9[%c18, %c0_67], %113 {strides = array<i32>} : memref<64x128xf32, #tpu.memory_space<vmem>>, vector<1x128xf32>,
    %c3_i32_68 = arith.constant 3 : i32
    %115 = arith.addi %0, %c3_i32_68 : i32
    %116 = arith.index_cast %115 : i32 to index
    %c2_69 = arith.constant 2 : index
    %117 = memref.load %arg1[%116, %c2_69] : memref<8x8xi32, #tpu.memory_space<smem>>
    %118 = arith.index_cast %117 : i32 to index
    %c0_70 = arith.constant 0 : index
    %119 = vector.load %arg2[%118, %c0_70] : memref<50x128xf32, #tpu.memory_space<vmem>>, vector<1x128xf32>
    %c19 = arith.constant 19 : index
    %c0_71 = arith.constant 0 : index
    %120 = vector.load %arg9[%c19, %c0_71] : memref<64x128xf32, #tpu.memory_space<vmem>>, vector<1x128xf32>
    tpu.vector_store %arg9[%c19, %c0_71], %119 {strides = array<i32>} : memref<64x128xf32, #tpu.memory_space<vmem>>, vector<1x128xf32>,
    %c4_i32_72 = arith.constant 4 : i32
    %121 = arith.addi %0, %c4_i32_72 : i32
    %122 = arith.index_cast %121 : i32 to index
    %c2_73 = arith.constant 2 : index
    %123 = memref.load %arg1[%122, %c2_73] : memref<8x8xi32, #tpu.memory_space<smem>>
    %124 = arith.index_cast %123 : i32 to index
    %c0_74 = arith.constant 0 : index
    %125 = vector.load %arg2[%124, %c0_74] : memref<50x128xf32, #tpu.memory_space<vmem>>, vector<1x128xf32>
    %c20 = arith.constant 20 : index
    %c0_75 = arith.constant 0 : index
    %126 = vector.load %arg9[%c20, %c0_75] : memref<64x128xf32, #tpu.memory_space<vmem>>, vector<1x128xf32>
    tpu.vector_store %arg9[%c20, %c0_75], %125 {strides = array<i32>} : memref<64x128xf32, #tpu.memory_space<vmem>>, vector<1x128xf32>,
    %c5_i32_76 = arith.constant 5 : i32
    %127 = arith.addi %0, %c5_i32_76 : i32
    %128 = arith.index_cast %127 : i32 to index
    %c2_77 = arith.constant 2 : index
    %129 = memref.load %arg1[%128, %c2_77] : memref<8x8xi32, #tpu.memory_space<smem>>
    %130 = arith.index_cast %129 : i32 to index
    %c0_78 = arith.constant 0 : index
    %131 = vector.load %arg2[%130, %c0_78] : memref<50x128xf32, #tpu.memory_space<vmem>>, vector<1x128xf32>
    %c21 = arith.constant 21 : index
    %c0_79 = arith.constant 0 : index
    %132 = vector.load %arg9[%c21, %c0_79] : memref<64x128xf32, #tpu.memory_space<vmem>>, vector<1x128xf32>
    tpu.vector_store %arg9[%c21, %c0_79], %131 {strides = array<i32>} : memref<64x128xf32, #tpu.memory_space<vmem>>, vector<1x128xf32>,
    %c6_i32_80 = arith.constant 6 : i32
    %133 = arith.addi %0, %c6_i32_80 : i32
    %134 = arith.index_cast %133 : i32 to index
    %c2_81 = arith.constant 2 : index
    %135 = memref.load %arg1[%134, %c2_81] : memref<8x8xi32, #tpu.memory_space<smem>>
    %136 = arith.index_cast %135 : i32 to index
    %c0_82 = arith.constant 0 : index
    %137 = vector.load %arg2[%136, %c0_82] : memref<50x128xf32, #tpu.memory_space<vmem>>, vector<1x128xf32>
    %c22 = arith.constant 22 : index
    %c0_83 = arith.constant 0 : index
    %138 = vector.load %arg9[%c22, %c0_83] : memref<64x128xf32, #tpu.memory_space<vmem>>, vector<1x128xf32>
    tpu.vector_store %arg9[%c22, %c0_83], %137 {strides = array<i32>} : memref<64x128xf32, #tpu.memory_space<vmem>>, vector<1x128xf32>,
    %c7_i32_84 = arith.constant 7 : i32
    %139 = arith.addi %0, %c7_i32_84 : i32
    %140 = arith.index_cast %139 : i32 to index
    %c2_85 = arith.constant 2 : index
    %141 = memref.load %arg1[%140, %c2_85] : memref<8x8xi32, #tpu.memory_space<smem>>
    %142 = arith.index_cast %141 : i32 to index
    %c0_86 = arith.constant 0 : index
    %143 = vector.load %arg2[%142, %c0_86] : memref<50x128xf32, #tpu.memory_space<vmem>>, vector<1x128xf32>
    %c23 = arith.constant 23 : index
    %c0_87 = arith.constant 0 : index
    %144 = vector.load %arg9[%c23, %c0_87] : memref<64x128xf32, #tpu.memory_space<vmem>>, vector<1x128xf32>
    tpu.vector_store %arg9[%c23, %c0_87], %143 {strides = array<i32>} : memref<64x128xf32, #tpu.memory_space<vmem>>, vector<1x128xf32>,
    %c0_i32_88 = arith.constant 0 : i32
    %145 = arith.addi %0, %c0_i32_88 : i32
    %146 = arith.index_cast %145 : i32 to index
    %c3_89 = arith.constant 3 : index
    %147 = memref.load %arg1[%146, %c3_89] : memref<8x8xi32, #tpu.memory_space<smem>>
    %148 = arith.index_cast %147 : i32 to index
    %c0_90 = arith.constant 0 : index
    %149 = vector.load %arg2[%148, %c0_90] : memref<50x128xf32, #tpu.memory_space<vmem>>, vector<1x128xf32>
    %c24 = arith.constant 24 : index
    %c0_91 = arith.constant 0 : index
    %150 = vector.load %arg9[%c24, %c0_91] : memref<64x128xf32, #tpu.memory_space<vmem>>, vector<1x128xf32>
    tpu.vector_store %arg9[%c24, %c0_91], %149 {strides = array<i32>} : memref<64x128xf32, #tpu.memory_space<vmem>>, vector<1x128xf32>,
    %c1_i32_92 = arith.constant 1 : i32
    %151 = arith.addi %0, %c1_i32_92 : i32
    %152 = arith.index_cast %151 : i32 to index
    %c3_93 = arith.constant 3 : index
    %153 = memref.load %arg1[%152, %c3_93] : memref<8x8xi32, #tpu.memory_space<smem>>
    %154 = arith.index_cast %153 : i32 to index
    %c0_94 = arith.constant 0 : index
    %155 = vector.load %arg2[%154, %c0_94] : memref<50x128xf32, #tpu.memory_space<vmem>>, vector<1x128xf32>
    %c25 = arith.constant 25 : index
    %c0_95 = arith.constant 0 : index
    %156 = vector.load %arg9[%c25, %c0_95] : memref<64x128xf32, #tpu.memory_space<vmem>>, vector<1x128xf32>
    tpu.vector_store %arg9[%c25, %c0_95], %155 {strides = array<i32>} : memref<64x128xf32, #tpu.memory_space<vmem>>, vector<1x128xf32>,
    %c2_i32_96 = arith.constant 2 : i32
    %157 = arith.addi %0, %c2_i32_96 : i32
    %158 = arith.index_cast %157 : i32 to index
    %c3_97 = arith.constant 3 : index
    %159 = memref.load %arg1[%158, %c3_97] : memref<8x8xi32, #tpu.memory_space<smem>>
    %160 = arith.index_cast %159 : i32 to index
    %c0_98 = arith.constant 0 : index
    %161 = vector.load %arg2[%160, %c0_98] : memref<50x128xf32, #tpu.memory_space<vmem>>, vector<1x128xf32>
    %c26 = arith.constant 26 : index
    %c0_99 = arith.constant 0 : index
    %162 = vector.load %arg9[%c26, %c0_99] : memref<64x128xf32, #tpu.memory_space<vmem>>, vector<1x128xf32>
    tpu.vector_store %arg9[%c26, %c0_99], %161 {strides = array<i32>} : memref<64x128xf32, #tpu.memory_space<vmem>>, vector<1x128xf32>,
    %c3_i32_100 = arith.constant 3 : i32
    %163 = arith.addi %0, %c3_i32_100 : i32
    %164 = arith.index_cast %163 : i32 to index
    %c3_101 = arith.constant 3 : index
    %165 = memref.load %arg1[%164, %c3_101] : memref<8x8xi32, #tpu.memory_space<smem>>
    %166 = arith.index_cast %165 : i32 to index
    %c0_102 = arith.constant 0 : index
    %167 = vector.load %arg2[%166, %c0_102] : memref<50x128xf32, #tpu.memory_space<vmem>>, vector<1x128xf32>
    %c27 = arith.constant 27 : index
    %c0_103 = arith.constant 0 : index
    %168 = vector.load %arg9[%c27, %c0_103] : memref<64x128xf32, #tpu.memory_space<vmem>>, vector<1x128xf32>
    tpu.vector_store %arg9[%c27, %c0_103], %167 {strides = array<i32>} : memref<64x128xf32, #tpu.memory_space<vmem>>, vector<1x128xf32>,
    %c4_i32_104 = arith.constant 4 : i32
    %169 = arith.addi %0, %c4_i32_104 : i32
    %170 = arith.index_cast %169 : i32 to index
    %c3_105 = arith.constant 3 : index
    %171 = memref.load %arg1[%170, %c3_105] : memref<8x8xi32, #tpu.memory_space<smem>>
    %172 = arith.index_cast %171 : i32 to index
    %c0_106 = arith.constant 0 : index
    %173 = vector.load %arg2[%172, %c0_106] : memref<50x128xf32, #tpu.memory_space<vmem>>, vector<1x128xf32>
    %c28 = arith.constant 28 : index
    %c0_107 = arith.constant 0 : index
    %174 = vector.load %arg9[%c28, %c0_107] : memref<64x128xf32, #tpu.memory_space<vmem>>, vector<1x128xf32>
    tpu.vector_store %arg9[%c28, %c0_107], %173 {strides = array<i32>} : memref<64x128xf32, #tpu.memory_space<vmem>>, vector<1x128xf32>,
    %c5_i32_108 = arith.constant 5 : i32
    %175 = arith.addi %0, %c5_i32_108 : i32
    %176 = arith.index_cast %175 : i32 to index
    %c3_109 = arith.constant 3 : index
    %177 = memref.load %arg1[%176, %c3_109] : memref<8x8xi32, #tpu.memory_space<smem>>
    %178 = arith.index_cast %177 : i32 to index
    %c0_110 = arith.constant 0 : index
    %179 = vector.load %arg2[%178, %c0_110] : memref<50x128xf32, #tpu.memory_space<vmem>>, vector<1x128xf32>
    %c29 = arith.constant 29 : index
    %c0_111 = arith.constant 0 : index
    %180 = vector.load %arg9[%c29, %c0_111] : memref<64x128xf32, #tpu.memory_space<vmem>>, vector<1x128xf32>
    tpu.vector_store %arg9[%c29, %c0_111], %179 {strides = array<i32>} : memref<64x128xf32, #tpu.memory_space<vmem>>, vector<1x128xf32>,
    %c6_i32_112 = arith.constant 6 : i32
    %181 = arith.addi %0, %c6_i32_112 : i32
    %182 = arith.index_cast %181 : i32 to index
    %c3_113 = arith.constant 3 : index
    %183 = memref.load %arg1[%182, %c3_113] : memref<8x8xi32, #tpu.memory_space<smem>>
    %184 = arith.index_cast %183 : i32 to index
    %c0_114 = arith.constant 0 : index
    %185 = vector.load %arg2[%184, %c0_114] : memref<50x128xf32, #tpu.memory_space<vmem>>, vector<1x128xf32>
    %c30 = arith.constant 30 : index
    %c0_115 = arith.constant 0 : index
    %186 = vector.load %arg9[%c30, %c0_115] : memref<64x128xf32, #tpu.memory_space<vmem>>, vector<1x128xf32>
    tpu.vector_store %arg9[%c30, %c0_115], %185 {strides = array<i32>} : memref<64x128xf32, #tpu.memory_space<vmem>>, vector<1x128xf32>,
    %c7_i32_116 = arith.constant 7 : i32
    %187 = arith.addi %0, %c7_i32_116 : i32
    %188 = arith.index_cast %187 : i32 to index
    %c3_117 = arith.constant 3 : index
    %189 = memref.load %arg1[%188, %c3_117] : memref<8x8xi32, #tpu.memory_space<smem>>
    %190 = arith.index_cast %189 : i32 to index
    %c0_118 = arith.constant 0 : index
    %191 = vector.load %arg2[%190, %c0_118] : memref<50x128xf32, #tpu.memory_space<vmem>>, vector<1x128xf32>
    %c31 = arith.constant 31 : index
    %c0_119 = arith.constant 0 : index
    %192 = vector.load %arg9[%c31, %c0_119] : memref<64x128xf32, #tpu.memory_space<vmem>>, vector<1x128xf32>
    tpu.vector_store %arg9[%c31, %c0_119], %191 {strides = array<i32>} : memref<64x128xf32, #tpu.memory_space<vmem>>, vector<1x128xf32>,
    %c0_i32_120 = arith.constant 0 : i32
    %193 = arith.addi %0, %c0_i32_120 : i32
    %194 = arith.index_cast %193 : i32 to index
    %c4_121 = arith.constant 4 : index
    %195 = memref.load %arg1[%194, %c4_121] : memref<8x8xi32, #tpu.memory_space<smem>>
    %196 = arith.index_cast %195 : i32 to index
    %c0_122 = arith.constant 0 : index
    %197 = vector.load %arg2[%196, %c0_122] : memref<50x128xf32, #tpu.memory_space<vmem>>, vector<1x128xf32>
    %c32 = arith.constant 32 : index
    %c0_123 = arith.constant 0 : index
    %198 = vector.load %arg9[%c32, %c0_123] : memref<64x128xf32, #tpu.memory_space<vmem>>, vector<1x128xf32>
    tpu.vector_store %arg9[%c32, %c0_123], %197 {strides = array<i32>} : memref<64x128xf32, #tpu.memory_space<vmem>>, vector<1x128xf32>,
    %c1_i32_124 = arith.constant 1 : i32
    %199 = arith.addi %0, %c1_i32_124 : i32
    %200 = arith.index_cast %199 : i32 to index
    %c4_125 = arith.constant 4 : index
    %201 = memref.load %arg1[%200, %c4_125] : memref<8x8xi32, #tpu.memory_space<smem>>
    %202 = arith.index_cast %201 : i32 to index
    %c0_126 = arith.constant 0 : index
    %203 = vector.load %arg2[%202, %c0_126] : memref<50x128xf32, #tpu.memory_space<vmem>>, vector<1x128xf32>
    %c33 = arith.constant 33 : index
    %c0_127 = arith.constant 0 : index
    %204 = vector.load %arg9[%c33, %c0_127] : memref<64x128xf32, #tpu.memory_space<vmem>>, vector<1x128xf32>
    tpu.vector_store %arg9[%c33, %c0_127], %203 {strides = array<i32>} : memref<64x128xf32, #tpu.memory_space<vmem>>, vector<1x128xf32>,
    %c2_i32_128 = arith.constant 2 : i32
    %205 = arith.addi %0, %c2_i32_128 : i32
    %206 = arith.index_cast %205 : i32 to index
    %c4_129 = arith.constant 4 : index
    %207 = memref.load %arg1[%206, %c4_129] : memref<8x8xi32, #tpu.memory_space<smem>>
    %208 = arith.index_cast %207 : i32 to index
    %c0_130 = arith.constant 0 : index
    %209 = vector.load %arg2[%208, %c0_130] : memref<50x128xf32, #tpu.memory_space<vmem>>, vector<1x128xf32>
    %c34 = arith.constant 34 : index
    %c0_131 = arith.constant 0 : index
    %210 = vector.load %arg9[%c34, %c0_131] : memref<64x128xf32, #tpu.memory_space<vmem>>, vector<1x128xf32>
    tpu.vector_store %arg9[%c34, %c0_131], %209 {strides = array<i32>} : memref<64x128xf32, #tpu.memory_space<vmem>>, vector<1x128xf32>,
    %c3_i32_132 = arith.constant 3 : i32
    %211 = arith.addi %0, %c3_i32_132 : i32
    %212 = arith.index_cast %211 : i32 to index
    %c4_133 = arith.constant 4 : index
    %213 = memref.load %arg1[%212, %c4_133] : memref<8x8xi32, #tpu.memory_space<smem>>
    %214 = arith.index_cast %213 : i32 to index
    %c0_134 = arith.constant 0 : index
    %215 = vector.load %arg2[%214, %c0_134] : memref<50x128xf32, #tpu.memory_space<vmem>>, vector<1x128xf32>
    %c35 = arith.constant 35 : index
    %c0_135 = arith.constant 0 : index
    %216 = vector.load %arg9[%c35, %c0_135] : memref<64x128xf32, #tpu.memory_space<vmem>>, vector<1x128xf32>
    tpu.vector_store %arg9[%c35, %c0_135], %215 {strides = array<i32>} : memref<64x128xf32, #tpu.memory_space<vmem>>, vector<1x128xf32>,
    %c4_i32_136 = arith.constant 4 : i32
    %217 = arith.addi %0, %c4_i32_136 : i32
    %218 = arith.index_cast %217 : i32 to index
    %c4_137 = arith.constant 4 : index
    %219 = memref.load %arg1[%218, %c4_137] : memref<8x8xi32, #tpu.memory_space<smem>>
    %220 = arith.index_cast %219 : i32 to index
    %c0_138 = arith.constant 0 : index
    %221 = vector.load %arg2[%220, %c0_138] : memref<50x128xf32, #tpu.memory_space<vmem>>, vector<1x128xf32>
    %c36 = arith.constant 36 : index
    %c0_139 = arith.constant 0 : index
    %222 = vector.load %arg9[%c36, %c0_139] : memref<64x128xf32, #tpu.memory_space<vmem>>, vector<1x128xf32>
    tpu.vector_store %arg9[%c36, %c0_139], %221 {strides = array<i32>} : memref<64x128xf32, #tpu.memory_space<vmem>>, vector<1x128xf32>,
    %c5_i32_140 = arith.constant 5 : i32
    %223 = arith.addi %0, %c5_i32_140 : i32
    %224 = arith.index_cast %223 : i32 to index
    %c4_141 = arith.constant 4 : index
    %225 = memref.load %arg1[%224, %c4_141] : memref<8x8xi32, #tpu.memory_space<smem>>
    %226 = arith.index_cast %225 : i32 to index
    %c0_142 = arith.constant 0 : index
    %227 = vector.load %arg2[%226, %c0_142] : memref<50x128xf32, #tpu.memory_space<vmem>>, vector<1x128xf32>
    %c37 = arith.constant 37 : index
    %c0_143 = arith.constant 0 : index
    %228 = vector.load %arg9[%c37, %c0_143] : memref<64x128xf32, #tpu.memory_space<vmem>>, vector<1x128xf32>
    tpu.vector_store %arg9[%c37, %c0_143], %227 {strides = array<i32>} : memref<64x128xf32, #tpu.memory_space<vmem>>, vector<1x128xf32>,
    %c6_i32_144 = arith.constant 6 : i32
    %229 = arith.addi %0, %c6_i32_144 : i32
    %230 = arith.index_cast %229 : i32 to index
    %c4_145 = arith.constant 4 : index
    %231 = memref.load %arg1[%230, %c4_145] : memref<8x8xi32, #tpu.memory_space<smem>>
    %232 = arith.index_cast %231 : i32 to index
    %c0_146 = arith.constant 0 : index
    %233 = vector.load %arg2[%232, %c0_146] : memref<50x128xf32, #tpu.memory_space<vmem>>, vector<1x128xf32>
    %c38 = arith.constant 38 : index
    %c0_147 = arith.constant 0 : index
    %234 = vector.load %arg9[%c38, %c0_147] : memref<64x128xf32, #tpu.memory_space<vmem>>, vector<1x128xf32>
    tpu.vector_store %arg9[%c38, %c0_147], %233 {strides = array<i32>} : memref<64x128xf32, #tpu.memory_space<vmem>>, vector<1x128xf32>,
    %c7_i32_148 = arith.constant 7 : i32
    %235 = arith.addi %0, %c7_i32_148 : i32
    %236 = arith.index_cast %235 : i32 to index
    %c4_149 = arith.constant 4 : index
    %237 = memref.load %arg1[%236, %c4_149] : memref<8x8xi32, #tpu.memory_space<smem>>
    %238 = arith.index_cast %237 : i32 to index
    %c0_150 = arith.constant 0 : index
    %239 = vector.load %arg2[%238, %c0_150] : memref<50x128xf32, #tpu.memory_space<vmem>>, vector<1x128xf32>
    %c39 = arith.constant 39 : index
    %c0_151 = arith.constant 0 : index
    %240 = vector.load %arg9[%c39, %c0_151] : memref<64x128xf32, #tpu.memory_space<vmem>>, vector<1x128xf32>
    tpu.vector_store %arg9[%c39, %c0_151], %239 {strides = array<i32>} : memref<64x128xf32, #tpu.memory_space<vmem>>, vector<1x128xf32>,
    %c0_i32_152 = arith.constant 0 : i32
    %241 = arith.addi %0, %c0_i32_152 : i32
    %242 = arith.index_cast %241 : i32 to index
    %c5_153 = arith.constant 5 : index
    %243 = memref.load %arg1[%242, %c5_153] : memref<8x8xi32, #tpu.memory_space<smem>>
    %244 = arith.index_cast %243 : i32 to index
    %c0_154 = arith.constant 0 : index
    %245 = vector.load %arg2[%244, %c0_154] : memref<50x128xf32, #tpu.memory_space<vmem>>, vector<1x128xf32>
    %c40 = arith.constant 40 : index
    %c0_155 = arith.constant 0 : index
    %246 = vector.load %arg9[%c40, %c0_155] : memref<64x128xf32, #tpu.memory_space<vmem>>, vector<1x128xf32>
    tpu.vector_store %arg9[%c40, %c0_155], %245 {strides = array<i32>} : memref<64x128xf32, #tpu.memory_space<vmem>>, vector<1x128xf32>,
    %c1_i32_156 = arith.constant 1 : i32
    %247 = arith.addi %0, %c1_i32_156 : i32
    %248 = arith.index_cast %247 : i32 to index
    %c5_157 = arith.constant 5 : index
    %249 = memref.load %arg1[%248, %c5_157] : memref<8x8xi32, #tpu.memory_space<smem>>
    %250 = arith.index_cast %249 : i32 to index
    %c0_158 = arith.constant 0 : index
    %251 = vector.load %arg2[%250, %c0_158] : memref<50x128xf32, #tpu.memory_space<vmem>>, vector<1x128xf32>
    %c41 = arith.constant 41 : index
    %c0_159 = arith.constant 0 : index
    %252 = vector.load %arg9[%c41, %c0_159] : memref<64x128xf32, #tpu.memory_space<vmem>>, vector<1x128xf32>
    tpu.vector_store %arg9[%c41, %c0_159], %251 {strides = array<i32>} : memref<64x128xf32, #tpu.memory_space<vmem>>, vector<1x128xf32>,
    %c2_i32_160 = arith.constant 2 : i32
    %253 = arith.addi %0, %c2_i32_160 : i32
    %254 = arith.index_cast %253 : i32 to index
    %c5_161 = arith.constant 5 : index
    %255 = memref.load %arg1[%254, %c5_161] : memref<8x8xi32, #tpu.memory_space<smem>>
    %256 = arith.index_cast %255 : i32 to index
    %c0_162 = arith.constant 0 : index
    %257 = vector.load %arg2[%256, %c0_162] : memref<50x128xf32, #tpu.memory_space<vmem>>, vector<1x128xf32>
    %c42 = arith.constant 42 : index
    %c0_163 = arith.constant 0 : index
    %258 = vector.load %arg9[%c42, %c0_163] : memref<64x128xf32, #tpu.memory_space<vmem>>, vector<1x128xf32>
    tpu.vector_store %arg9[%c42, %c0_163], %257 {strides = array<i32>} : memref<64x128xf32, #tpu.memory_space<vmem>>, vector<1x128xf32>,
    %c3_i32_164 = arith.constant 3 : i32
    %259 = arith.addi %0, %c3_i32_164 : i32
    %260 = arith.index_cast %259 : i32 to index
    %c5_165 = arith.constant 5 : index
    %261 = memref.load %arg1[%260, %c5_165] : memref<8x8xi32, #tpu.memory_space<smem>>
    %262 = arith.index_cast %261 : i32 to index
    %c0_166 = arith.constant 0 : index
    %263 = vector.load %arg2[%262, %c0_166] : memref<50x128xf32, #tpu.memory_space<vmem>>, vector<1x128xf32>
    %c43 = arith.constant 43 : index
    %c0_167 = arith.constant 0 : index
    %264 = vector.load %arg9[%c43, %c0_167] : memref<64x128xf32, #tpu.memory_space<vmem>>, vector<1x128xf32>
    tpu.vector_store %arg9[%c43, %c0_167], %263 {strides = array<i32>} : memref<64x128xf32, #tpu.memory_space<vmem>>, vector<1x128xf32>,
    %c4_i32_168 = arith.constant 4 : i32
    %265 = arith.addi %0, %c4_i32_168 : i32
    %266 = arith.index_cast %265 : i32 to index
    %c5_169 = arith.constant 5 : index
    %267 = memref.load %arg1[%266, %c5_169] : memref<8x8xi32, #tpu.memory_space<smem>>
    %268 = arith.index_cast %267 : i32 to index
    %c0_170 = arith.constant 0 : index
    %269 = vector.load %arg2[%268, %c0_170] : memref<50x128xf32, #tpu.memory_space<vmem>>, vector<1x128xf32>
    %c44 = arith.constant 44 : index
    %c0_171 = arith.constant 0 : index
    %270 = vector.load %arg9[%c44, %c0_171] : memref<64x128xf32, #tpu.memory_space<vmem>>, vector<1x128xf32>
    tpu.vector_store %arg9[%c44, %c0_171], %269 {strides = array<i32>} : memref<64x128xf32, #tpu.memory_space<vmem>>, vector<1x128xf32>,
    %c5_i32_172 = arith.constant 5 : i32
    %271 = arith.addi %0, %c5_i32_172 : i32
    %272 = arith.index_cast %271 : i32 to index
    %c5_173 = arith.constant 5 : index
    %273 = memref.load %arg1[%272, %c5_173] : memref<8x8xi32, #tpu.memory_space<smem>>
    %274 = arith.index_cast %273 : i32 to index
    %c0_174 = arith.constant 0 : index
    %275 = vector.load %arg2[%274, %c0_174] : memref<50x128xf32, #tpu.memory_space<vmem>>, vector<1x128xf32>
    %c45 = arith.constant 45 : index
    %c0_175 = arith.constant 0 : index
    %276 = vector.load %arg9[%c45, %c0_175] : memref<64x128xf32, #tpu.memory_space<vmem>>, vector<1x128xf32>
    tpu.vector_store %arg9[%c45, %c0_175], %275 {strides = array<i32>} : memref<64x128xf32, #tpu.memory_space<vmem>>, vector<1x128xf32>,
    %c6_i32_176 = arith.constant 6 : i32
    %277 = arith.addi %0, %c6_i32_176 : i32
    %278 = arith.index_cast %277 : i32 to index
    %c5_177 = arith.constant 5 : index
    %279 = memref.load %arg1[%278, %c5_177] : memref<8x8xi32, #tpu.memory_space<smem>>
    %280 = arith.index_cast %279 : i32 to index
    %c0_178 = arith.constant 0 : index
    %281 = vector.load %arg2[%280, %c0_178] : memref<50x128xf32, #tpu.memory_space<vmem>>, vector<1x128xf32>
    %c46 = arith.constant 46 : index
    %c0_179 = arith.constant 0 : index
    %282 = vector.load %arg9[%c46, %c0_179] : memref<64x128xf32, #tpu.memory_space<vmem>>, vector<1x128xf32>
    tpu.vector_store %arg9[%c46, %c0_179], %281 {strides = array<i32>} : memref<64x128xf32, #tpu.memory_space<vmem>>, vector<1x128xf32>,
    %c7_i32_180 = arith.constant 7 : i32
    %283 = arith.addi %0, %c7_i32_180 : i32
    %284 = arith.index_cast %283 : i32 to index
    %c5_181 = arith.constant 5 : index
    %285 = memref.load %arg1[%284, %c5_181] : memref<8x8xi32, #tpu.memory_space<smem>>
    %286 = arith.index_cast %285 : i32 to index
    %c0_182 = arith.constant 0 : index
    %287 = vector.load %arg2[%286, %c0_182] : memref<50x128xf32, #tpu.memory_space<vmem>>, vector<1x128xf32>
    %c47 = arith.constant 47 : index
    %c0_183 = arith.constant 0 : index
    %288 = vector.load %arg9[%c47, %c0_183] : memref<64x128xf32, #tpu.memory_space<vmem>>, vector<1x128xf32>
    tpu.vector_store %arg9[%c47, %c0_183], %287 {strides = array<i32>} : memref<64x128xf32, #tpu.memory_space<vmem>>, vector<1x128xf32>,
    %c0_i32_184 = arith.constant 0 : i32
    %289 = arith.addi %0, %c0_i32_184 : i32
    %290 = arith.index_cast %289 : i32 to index
    %c6_185 = arith.constant 6 : index
    %291 = memref.load %arg1[%290, %c6_185] : memref<8x8xi32, #tpu.memory_space<smem>>
    %292 = arith.index_cast %291 : i32 to index
    %c0_186 = arith.constant 0 : index
    %293 = vector.load %arg2[%292, %c0_186] : memref<50x128xf32, #tpu.memory_space<vmem>>, vector<1x128xf32>
    %c48 = arith.constant 48 : index
    %c0_187 = arith.constant 0 : index
    %294 = vector.load %arg9[%c48, %c0_187] : memref<64x128xf32, #tpu.memory_space<vmem>>, vector<1x128xf32>
    tpu.vector_store %arg9[%c48, %c0_187], %293 {strides = array<i32>} : memref<64x128xf32, #tpu.memory_space<vmem>>, vector<1x128xf32>,
    %c1_i32_188 = arith.constant 1 : i32
    %295 = arith.addi %0, %c1_i32_188 : i32
    %296 = arith.index_cast %295 : i32 to index
    %c6_189 = arith.constant 6 : index
    %297 = memref.load %arg1[%296, %c6_189] : memref<8x8xi32, #tpu.memory_space<smem>>
    %298 = arith.index_cast %297 : i32 to index
    %c0_190 = arith.constant 0 : index
    %299 = vector.load %arg2[%298, %c0_190] : memref<50x128xf32, #tpu.memory_space<vmem>>, vector<1x128xf32>
    %c49 = arith.constant 49 : index
    %c0_191 = arith.constant 0 : index
    %300 = vector.load %arg9[%c49, %c0_191] : memref<64x128xf32, #tpu.memory_space<vmem>>, vector<1x128xf32>
    tpu.vector_store %arg9[%c49, %c0_191], %299 {strides = array<i32>} : memref<64x128xf32, #tpu.memory_space<vmem>>, vector<1x128xf32>,
    %c2_i32_192 = arith.constant 2 : i32
    %301 = arith.addi %0, %c2_i32_192 : i32
    %302 = arith.index_cast %301 : i32 to index
    %c6_193 = arith.constant 6 : index
    %303 = memref.load %arg1[%302, %c6_193] : memref<8x8xi32, #tpu.memory_space<smem>>
    %304 = arith.index_cast %303 : i32 to index
    %c0_194 = arith.constant 0 : index
    %305 = vector.load %arg2[%304, %c0_194] : memref<50x128xf32, #tpu.memory_space<vmem>>, vector<1x128xf32>
    %c50 = arith.constant 50 : index
    %c0_195 = arith.constant 0 : index
    %306 = vector.load %arg9[%c50, %c0_195] : memref<64x128xf32, #tpu.memory_space<vmem>>, vector<1x128xf32>
    tpu.vector_store %arg9[%c50, %c0_195], %305 {strides = array<i32>} : memref<64x128xf32, #tpu.memory_space<vmem>>, vector<1x128xf32>,
    %c3_i32_196 = arith.constant 3 : i32
    %307 = arith.addi %0, %c3_i32_196 : i32
    %308 = arith.index_cast %307 : i32 to index
    %c6_197 = arith.constant 6 : index
    %309 = memref.load %arg1[%308, %c6_197] : memref<8x8xi32, #tpu.memory_space<smem>>
    %310 = arith.index_cast %309 : i32 to index
    %c0_198 = arith.constant 0 : index
    %311 = vector.load %arg2[%310, %c0_198] : memref<50x128xf32, #tpu.memory_space<vmem>>, vector<1x128xf32>
    %c51 = arith.constant 51 : index
    %c0_199 = arith.constant 0 : index
    %312 = vector.load %arg9[%c51, %c0_199] : memref<64x128xf32, #tpu.memory_space<vmem>>, vector<1x128xf32>
    tpu.vector_store %arg9[%c51, %c0_199], %311 {strides = array<i32>} : memref<64x128xf32, #tpu.memory_space<vmem>>, vector<1x128xf32>,
    %c4_i32_200 = arith.constant 4 : i32
    %313 = arith.addi %0, %c4_i32_200 : i32
    %314 = arith.index_cast %313 : i32 to index
    %c6_201 = arith.constant 6 : index
    %315 = memref.load %arg1[%314, %c6_201] : memref<8x8xi32, #tpu.memory_space<smem>>
    %316 = arith.index_cast %315 : i32 to index
    %c0_202 = arith.constant 0 : index
    %317 = vector.load %arg2[%316, %c0_202] : memref<50x128xf32, #tpu.memory_space<vmem>>, vector<1x128xf32>
    %c52 = arith.constant 52 : index
    %c0_203 = arith.constant 0 : index
    %318 = vector.load %arg9[%c52, %c0_203] : memref<64x128xf32, #tpu.memory_space<vmem>>, vector<1x128xf32>
    tpu.vector_store %arg9[%c52, %c0_203], %317 {strides = array<i32>} : memref<64x128xf32, #tpu.memory_space<vmem>>, vector<1x128xf32>,
    %c5_i32_204 = arith.constant 5 : i32
    %319 = arith.addi %0, %c5_i32_204 : i32
    %320 = arith.index_cast %319 : i32 to index
    %c6_205 = arith.constant 6 : index
    %321 = memref.load %arg1[%320, %c6_205] : memref<8x8xi32, #tpu.memory_space<smem>>
    %322 = arith.index_cast %321 : i32 to index
    %c0_206 = arith.constant 0 : index
    %323 = vector.load %arg2[%322, %c0_206] : memref<50x128xf32, #tpu.memory_space<vmem>>, vector<1x128xf32>
    %c53 = arith.constant 53 : index
    %c0_207 = arith.constant 0 : index
    %324 = vector.load %arg9[%c53, %c0_207] : memref<64x128xf32, #tpu.memory_space<vmem>>, vector<1x128xf32>
    tpu.vector_store %arg9[%c53, %c0_207], %323 {strides = array<i32>} : memref<64x128xf32, #tpu.memory_space<vmem>>, vector<1x128xf32>,
    %c6_i32_208 = arith.constant 6 : i32
    %325 = arith.addi %0, %c6_i32_208 : i32
    %326 = arith.index_cast %325 : i32 to index
    %c6_209 = arith.constant 6 : index
    %327 = memref.load %arg1[%326, %c6_209] : memref<8x8xi32, #tpu.memory_space<smem>>
    %328 = arith.index_cast %327 : i32 to index
    %c0_210 = arith.constant 0 : index
    %329 = vector.load %arg2[%328, %c0_210] : memref<50x128xf32, #tpu.memory_space<vmem>>, vector<1x128xf32>
    %c54 = arith.constant 54 : index
    %c0_211 = arith.constant 0 : index
    %330 = vector.load %arg9[%c54, %c0_211] : memref<64x128xf32, #tpu.memory_space<vmem>>, vector<1x128xf32>
    tpu.vector_store %arg9[%c54, %c0_211], %329 {strides = array<i32>} : memref<64x128xf32, #tpu.memory_space<vmem>>, vector<1x128xf32>,
    %c7_i32_212 = arith.constant 7 : i32
    %331 = arith.addi %0, %c7_i32_212 : i32
    %332 = arith.index_cast %331 : i32 to index
    %c6_213 = arith.constant 6 : index
    %333 = memref.load %arg1[%332, %c6_213] : memref<8x8xi32, #tpu.memory_space<smem>>
    %334 = arith.index_cast %333 : i32 to index
    %c0_214 = arith.constant 0 : index
    %335 = vector.load %arg2[%334, %c0_214] : memref<50x128xf32, #tpu.memory_space<vmem>>, vector<1x128xf32>
    %c55 = arith.constant 55 : index
    %c0_215 = arith.constant 0 : index
    %336 = vector.load %arg9[%c55, %c0_215] : memref<64x128xf32, #tpu.memory_space<vmem>>, vector<1x128xf32>
    tpu.vector_store %arg9[%c55, %c0_215], %335 {strides = array<i32>} : memref<64x128xf32, #tpu.memory_space<vmem>>, vector<1x128xf32>,
    %c0_i32_216 = arith.constant 0 : i32
    %337 = arith.addi %0, %c0_i32_216 : i32
    %338 = arith.index_cast %337 : i32 to index
    %c7_217 = arith.constant 7 : index
    %339 = memref.load %arg1[%338, %c7_217] : memref<8x8xi32, #tpu.memory_space<smem>>
    %340 = arith.index_cast %339 : i32 to index
    %c0_218 = arith.constant 0 : index
    %341 = vector.load %arg2[%340, %c0_218] : memref<50x128xf32, #tpu.memory_space<vmem>>, vector<1x128xf32>
    %c56 = arith.constant 56 : index
    %c0_219 = arith.constant 0 : index
    %342 = vector.load %arg9[%c56, %c0_219] : memref<64x128xf32, #tpu.memory_space<vmem>>, vector<1x128xf32>
    tpu.vector_store %arg9[%c56, %c0_219], %341 {strides = array<i32>} : memref<64x128xf32, #tpu.memory_space<vmem>>, vector<1x128xf32>,
    %c1_i32_220 = arith.constant 1 : i32
    %343 = arith.addi %0, %c1_i32_220 : i32
    %344 = arith.index_cast %343 : i32 to index
    %c7_221 = arith.constant 7 : index
    %345 = memref.load %arg1[%344, %c7_221] : memref<8x8xi32, #tpu.memory_space<smem>>
    %346 = arith.index_cast %345 : i32 to index
    %c0_222 = arith.constant 0 : index
    %347 = vector.load %arg2[%346, %c0_222] : memref<50x128xf32, #tpu.memory_space<vmem>>, vector<1x128xf32>
    %c57 = arith.constant 57 : index
    %c0_223 = arith.constant 0 : index
    %348 = vector.load %arg9[%c57, %c0_223] : memref<64x128xf32, #tpu.memory_space<vmem>>, vector<1x128xf32>
    tpu.vector_store %arg9[%c57, %c0_223], %347 {strides = array<i32>} : memref<64x128xf32, #tpu.memory_space<vmem>>, vector<1x128xf32>,
    %c2_i32_224 = arith.constant 2 : i32
    %349 = arith.addi %0, %c2_i32_224 : i32
    %350 = arith.index_cast %349 : i32 to index
    %c7_225 = arith.constant 7 : index
    %351 = memref.load %arg1[%350, %c7_225] : memref<8x8xi32, #tpu.memory_space<smem>>
    %352 = arith.index_cast %351 : i32 to index
    %c0_226 = arith.constant 0 : index
    %353 = vector.load %arg2[%352, %c0_226] : memref<50x128xf32, #tpu.memory_space<vmem>>, vector<1x128xf32>
    %c58 = arith.constant 58 : index
    %c0_227 = arith.constant 0 : index
    %354 = vector.load %arg9[%c58, %c0_227] : memref<64x128xf32, #tpu.memory_space<vmem>>, vector<1x128xf32>
    tpu.vector_store %arg9[%c58, %c0_227], %353 {strides = array<i32>} : memref<64x128xf32, #tpu.memory_space<vmem>>, vector<1x128xf32>,
    %c3_i32_228 = arith.constant 3 : i32
    %355 = arith.addi %0, %c3_i32_228 : i32
    %356 = arith.index_cast %355 : i32 to index
    %c7_229 = arith.constant 7 : index
    %357 = memref.load %arg1[%356, %c7_229] : memref<8x8xi32, #tpu.memory_space<smem>>
    %358 = arith.index_cast %357 : i32 to index
    %c0_230 = arith.constant 0 : index
    %359 = vector.load %arg2[%358, %c0_230] : memref<50x128xf32, #tpu.memory_space<vmem>>, vector<1x128xf32>
    %c59 = arith.constant 59 : index
    %c0_231 = arith.constant 0 : index
    %360 = vector.load %arg9[%c59, %c0_231] : memref<64x128xf32, #tpu.memory_space<vmem>>, vector<1x128xf32>
    tpu.vector_store %arg9[%c59, %c0_231], %359 {strides = array<i32>} : memref<64x128xf32, #tpu.memory_space<vmem>>, vector<1x128xf32>,
    %c4_i32_232 = arith.constant 4 : i32
    %361 = arith.addi %0, %c4_i32_232 : i32
    %362 = arith.index_cast %361 : i32 to index
    %c7_233 = arith.constant 7 : index
    %363 = memref.load %arg1[%362, %c7_233] : memref<8x8xi32, #tpu.memory_space<smem>>
    %364 = arith.index_cast %363 : i32 to index
    %c0_234 = arith.constant 0 : index
    %365 = vector.load %arg2[%364, %c0_234] : memref<50x128xf32, #tpu.memory_space<vmem>>, vector<1x128xf32>
    %c60 = arith.constant 60 : index
    %c0_235 = arith.constant 0 : index
    %366 = vector.load %arg9[%c60, %c0_235] : memref<64x128xf32, #tpu.memory_space<vmem>>, vector<1x128xf32>
    tpu.vector_store %arg9[%c60, %c0_235], %365 {strides = array<i32>} : memref<64x128xf32, #tpu.memory_space<vmem>>, vector<1x128xf32>,
    %c5_i32_236 = arith.constant 5 : i32
    %367 = arith.addi %0, %c5_i32_236 : i32
    %368 = arith.index_cast %367 : i32 to index
    %c7_237 = arith.constant 7 : index
    %369 = memref.load %arg1[%368, %c7_237] : memref<8x8xi32, #tpu.memory_space<smem>>
    %370 = arith.index_cast %369 : i32 to index
    %c0_238 = arith.constant 0 : index
    %371 = vector.load %arg2[%370, %c0_238] : memref<50x128xf32, #tpu.memory_space<vmem>>, vector<1x128xf32>
    %c61 = arith.constant 61 : index
    %c0_239 = arith.constant 0 : index
    %372 = vector.load %arg9[%c61, %c0_239] : memref<64x128xf32, #tpu.memory_space<vmem>>, vector<1x128xf32>
    tpu.vector_store %arg9[%c61, %c0_239], %371 {strides = array<i32>} : memref<64x128xf32, #tpu.memory_space<vmem>>, vector<1x128xf32>,
    %c6_i32_240 = arith.constant 6 : i32
    %373 = arith.addi %0, %c6_i32_240 : i32
    %374 = arith.index_cast %373 : i32 to index
    %c7_241 = arith.constant 7 : index
    %375 = memref.load %arg1[%374, %c7_241] : memref<8x8xi32, #tpu.memory_space<smem>>
    %376 = arith.index_cast %375 : i32 to index
    %c0_242 = arith.constant 0 : index
    %377 = vector.load %arg2[%376, %c0_242] : memref<50x128xf32, #tpu.memory_space<vmem>>, vector<1x128xf32>
    %c62 = arith.constant 62 : index
    %c0_243 = arith.constant 0 : index
    %378 = vector.load %arg9[%c62, %c0_243] : memref<64x128xf32, #tpu.memory_space<vmem>>, vector<1x128xf32>
    tpu.vector_store %arg9[%c62, %c0_243], %377 {strides = array<i32>} : memref<64x128xf32, #tpu.memory_space<vmem>>, vector<1x128xf32>,
    %c7_i32_244 = arith.constant 7 : i32
    %379 = arith.addi %0, %c7_i32_244 : i32
    %380 = arith.index_cast %379 : i32 to index
    %c7_245 = arith.constant 7 : index
    %381 = memref.load %arg1[%380, %c7_245] : memref<8x8xi32, #tpu.memory_space<smem>>
    %382 = arith.index_cast %381 : i32 to index
    %c0_246 = arith.constant 0 : index
    %383 = vector.load %arg2[%382, %c0_246] : memref<50x128xf32, #tpu.memory_space<vmem>>, vector<1x128xf32>
    %c63 = arith.constant 63 : index
    %c0_247 = arith.constant 0 : index
    %384 = vector.load %arg9[%c63, %c0_247] : memref<64x128xf32, #tpu.memory_space<vmem>>, vector<1x128xf32>
    tpu.vector_store %arg9[%c63, %c0_247], %383 {strides = array<i32>} : memref<64x128xf32, #tpu.memory_space<vmem>>, vector<1x128xf32>,
    %c0_248 = arith.constant 0 : index
    %c0_249 = arith.constant 0 : index
    %385 = vector.load %arg9[%c0_248, %c0_249] : memref<64x128xf32, #tpu.memory_space<vmem>>, vector<64x128xf32>
    %c0_250 = arith.constant 0 : index
    %c0_251 = arith.constant 0 : index
    %386 = vector.load %arg3[%c0_250, %c0_251] : memref<128x128xf32, #tpu.memory_space<vmem>>, vector<128x128xf32>
    %cst = arith.constant dense<0.000000e+00> : vector<64x128xf32>
    %387 = tpu.matmul %385, %386, %cst {dimension_numbers = #tpu.dot_dimension_numbers<[1], [0], [0], [1], [0, 0, 1, 1], [], []>} : vector<64x128xf32>, vector<128x128xf32>, vector<64x128xf32> -> vector<64x128xf32>
    %c0_252 = arith.constant 0 : index
    %c0_253 = arith.constant 0 : index
    %388 = vector.load %arg5[%c0_252, %c0_253] : memref<1x128xf32, #tpu.memory_space<vmem>>, vector<1x128xf32>
    %389 = vector.broadcast %388 : vector<1x128xf32> to vector<64x128xf32>
    %390 = arith.addf %387, %389 : vector<64x128xf32>
    %c0_254 = arith.constant 0 : index
    %c0_255 = arith.constant 0 : index
    %391 = vector.load %arg10[%c0_254, %c0_255] : memref<64x128xf32, #tpu.memory_space<vmem>>, vector<64x128xf32>
    tpu.vector_store %arg10[%c0_254, %c0_255], %390 {strides = array<i32>} : memref<64x128xf32, #tpu.memory_space<vmem>>, vector<64x128xf32>,
    %c0_256 = arith.constant 0 : index
    %c0_257 = arith.constant 0 : index
    %392 = vector.load %arg4[%c0_256, %c0_257] : memref<32x128xf32, #tpu.memory_space<vmem>>, vector<32x128xf32>
    %cst_258 = arith.constant 0.000000e+00 : f32
    %393 = vector.broadcast %cst_258 : f32 to vector<8x32xf32>
    %cst_259 = arith.constant 0.000000e+00 : f32
    %394 = vector.broadcast %cst_259 : f32 to vector<8x32xf32>
    %c0_260 = arith.constant 0 : index
    %c0_261 = arith.constant 0 : index
    %395 = vector.load %arg10[%c0_260, %c0_261] : memref<64x128xf32, #tpu.memory_space<vmem>>, vector<8x128xf32>
    %cst_262 = arith.constant dense<0.000000e+00> : vector<8x128xf32>
    %396 = tpu.matmul %393, %392, %cst_262 {dimension_numbers = #tpu.dot_dimension_numbers<[1], [0], [0], [1], [0, 0, 1, 1], [], []>} : vector<8x32xf32>, vector<32x128xf32>, vector<8x128xf32> -> vector<8x128xf32>
    %397 = arith.addf %395, %396 : vector<8x128xf32>
    %398 = arith.negf %397 : vector<8x128xf32>
    %399 = math.exp %398 : vector<8x128xf32>
    %cst_263 = arith.constant 1.000000e+00 : f32
    %400 = vector.broadcast %cst_263 : f32 to vector<8x128xf32>
    %401 = arith.addf %400, %399 : vector<8x128xf32>
    %402 = arith.divf %400, %401 : vector<8x128xf32>
    %403 = vector.extract_strided_slice %402 {offsets = [0, 0], sizes = [8, 32], strides = [1, 1]} : vector<8x128xf32> to vector<8x32xf32>
    %404 = vector.extract_strided_slice %402 {offsets = [0, 32], sizes = [8, 32], strides = [1, 1]} : vector<8x128xf32> to vector<8x32xf32>
    %405 = vector.extract_strided_slice %397 {offsets = [0, 64], sizes = [8, 32], strides = [1, 1]} : vector<8x128xf32> to vector<8x32xf32>
    %406 = math.tanh %405 : vector<8x32xf32>
    %407 = vector.extract_strided_slice %402 {offsets = [0, 96], sizes = [8, 32], strides = [1, 1]} : vector<8x128xf32> to vector<8x32xf32>
    %408 = arith.mulf %404, %394 : vector<8x32xf32>
    %409 = arith.mulf %403, %406 : vector<8x32xf32>
    %410 = arith.addf %408, %409 : vector<8x32xf32>
    %411 = math.tanh %410 : vector<8x32xf32>
    %412 = arith.mulf %407, %411 : vector<8x32xf32>
    %c0_264 = arith.constant 0 : index
    %c0_265 = arith.constant 0 : index
    %413 = vector.load %arg11[%c0_264, %c0_265] : memref<64x32xf32, #tpu.memory_space<vmem>>, vector<8x32xf32>
    tpu.vector_store %arg11[%c0_264, %c0_265], %412 {strides = array<i32>} : memref<64x32xf32, #tpu.memory_space<vmem>>, vector<8x32xf32>,
    %c8_266 = arith.constant 8 : index
    %c0_267 = arith.constant 0 : index
    %414 = vector.load %arg10[%c8_266, %c0_267] : memref<64x128xf32, #tpu.memory_space<vmem>>, vector<8x128xf32>
    %cst_268 = arith.constant dense<0.000000e+00> : vector<8x128xf32>
    %415 = tpu.matmul %412, %392, %cst_268 {dimension_numbers = #tpu.dot_dimension_numbers<[1], [0], [0], [1], [0, 0, 1, 1], [], []>} : vector<8x32xf32>, vector<32x128xf32>, vector<8x128xf32> -> vector<8x128xf32>
    %416 = arith.addf %414, %415 : vector<8x128xf32>
    %417 = arith.negf %416 : vector<8x128xf32>
    %418 = math.exp %417 : vector<8x128xf32>
    %cst_269 = arith.constant 1.000000e+00 : f32
    %419 = vector.broadcast %cst_269 : f32 to vector<8x128xf32>
    %420 = arith.addf %419, %418 : vector<8x128xf32>
    %421 = arith.divf %419, %420 : vector<8x128xf32>
    %422 = vector.extract_strided_slice %421 {offsets = [0, 0], sizes = [8, 32], strides = [1, 1]} : vector<8x128xf32> to vector<8x32xf32>
    %423 = vector.extract_strided_slice %421 {offsets = [0, 32], sizes = [8, 32], strides = [1, 1]} : vector<8x128xf32> to vector<8x32xf32>
    %424 = vector.extract_strided_slice %416 {offsets = [0, 64], sizes = [8, 32], strides = [1, 1]} : vector<8x128xf32> to vector<8x32xf32>
    %425 = math.tanh %424 : vector<8x32xf32>
    %426 = vector.extract_strided_slice %421 {offsets = [0, 96], sizes = [8, 32], strides = [1, 1]} : vector<8x128xf32> to vector<8x32xf32>
    %427 = arith.mulf %423, %410 : vector<8x32xf32>
    %428 = arith.mulf %422, %425 : vector<8x32xf32>
    %429 = arith.addf %427, %428 : vector<8x32xf32>
    %430 = math.tanh %429 : vector<8x32xf32>
    %431 = arith.mulf %426, %430 : vector<8x32xf32>
    %c8_270 = arith.constant 8 : index
    %c0_271 = arith.constant 0 : index
    %432 = vector.load %arg11[%c8_270, %c0_271] : memref<64x32xf32, #tpu.memory_space<vmem>>, vector<8x32xf32>
    tpu.vector_store %arg11[%c8_270, %c0_271], %431 {strides = array<i32>} : memref<64x32xf32, #tpu.memory_space<vmem>>, vector<8x32xf32>,
    %c16_272 = arith.constant 16 : index
    %c0_273 = arith.constant 0 : index
    %433 = vector.load %arg10[%c16_272, %c0_273] : memref<64x128xf32, #tpu.memory_space<vmem>>, vector<8x128xf32>
    %cst_274 = arith.constant dense<0.000000e+00> : vector<8x128xf32>
    %434 = tpu.matmul %431, %392, %cst_274 {dimension_numbers = #tpu.dot_dimension_numbers<[1], [0], [0], [1], [0, 0, 1, 1], [], []>} : vector<8x32xf32>, vector<32x128xf32>, vector<8x128xf32> -> vector<8x128xf32>
    %435 = arith.addf %433, %434 : vector<8x128xf32>
    %436 = arith.negf %435 : vector<8x128xf32>
    %437 = math.exp %436 : vector<8x128xf32>
    %cst_275 = arith.constant 1.000000e+00 : f32
    %438 = vector.broadcast %cst_275 : f32 to vector<8x128xf32>
    %439 = arith.addf %438, %437 : vector<8x128xf32>
    %440 = arith.divf %438, %439 : vector<8x128xf32>
    %441 = vector.extract_strided_slice %440 {offsets = [0, 0], sizes = [8, 32], strides = [1, 1]} : vector<8x128xf32> to vector<8x32xf32>
    %442 = vector.extract_strided_slice %440 {offsets = [0, 32], sizes = [8, 32], strides = [1, 1]} : vector<8x128xf32> to vector<8x32xf32>
    %443 = vector.extract_strided_slice %435 {offsets = [0, 64], sizes = [8, 32], strides = [1, 1]} : vector<8x128xf32> to vector<8x32xf32>
    %444 = math.tanh %443 : vector<8x32xf32>
    %445 = vector.extract_strided_slice %440 {offsets = [0, 96], sizes = [8, 32], strides = [1, 1]} : vector<8x128xf32> to vector<8x32xf32>
    %446 = arith.mulf %442, %429 : vector<8x32xf32>
    %447 = arith.mulf %441, %444 : vector<8x32xf32>
    %448 = arith.addf %446, %447 : vector<8x32xf32>
    %449 = math.tanh %448 : vector<8x32xf32>
    %450 = arith.mulf %445, %449 : vector<8x32xf32>
    %c16_276 = arith.constant 16 : index
    %c0_277 = arith.constant 0 : index
    %451 = vector.load %arg11[%c16_276, %c0_277] : memref<64x32xf32, #tpu.memory_space<vmem>>, vector<8x32xf32>
    tpu.vector_store %arg11[%c16_276, %c0_277], %450 {strides = array<i32>} : memref<64x32xf32, #tpu.memory_space<vmem>>, vector<8x32xf32>,
    %c24_278 = arith.constant 24 : index
    %c0_279 = arith.constant 0 : index
    %452 = vector.load %arg10[%c24_278, %c0_279] : memref<64x128xf32, #tpu.memory_space<vmem>>, vector<8x128xf32>
    %cst_280 = arith.constant dense<0.000000e+00> : vector<8x128xf32>
    %453 = tpu.matmul %450, %392, %cst_280 {dimension_numbers = #tpu.dot_dimension_numbers<[1], [0], [0], [1], [0, 0, 1, 1], [], []>} : vector<8x32xf32>, vector<32x128xf32>, vector<8x128xf32> -> vector<8x128xf32>
    %454 = arith.addf %452, %453 : vector<8x128xf32>
    %455 = arith.negf %454 : vector<8x128xf32>
    %456 = math.exp %455 : vector<8x128xf32>
    %cst_281 = arith.constant 1.000000e+00 : f32
    %457 = vector.broadcast %cst_281 : f32 to vector<8x128xf32>
    %458 = arith.addf %457, %456 : vector<8x128xf32>
    %459 = arith.divf %457, %458 : vector<8x128xf32>
    %460 = vector.extract_strided_slice %459 {offsets = [0, 0], sizes = [8, 32], strides = [1, 1]} : vector<8x128xf32> to vector<8x32xf32>
    %461 = vector.extract_strided_slice %459 {offsets = [0, 32], sizes = [8, 32], strides = [1, 1]} : vector<8x128xf32> to vector<8x32xf32>
    %462 = vector.extract_strided_slice %454 {offsets = [0, 64], sizes = [8, 32], strides = [1, 1]} : vector<8x128xf32> to vector<8x32xf32>
    %463 = math.tanh %462 : vector<8x32xf32>
    %464 = vector.extract_strided_slice %459 {offsets = [0, 96], sizes = [8, 32], strides = [1, 1]} : vector<8x128xf32> to vector<8x32xf32>
    %465 = arith.mulf %461, %448 : vector<8x32xf32>
    %466 = arith.mulf %460, %463 : vector<8x32xf32>
    %467 = arith.addf %465, %466 : vector<8x32xf32>
    %468 = math.tanh %467 : vector<8x32xf32>
    %469 = arith.mulf %464, %468 : vector<8x32xf32>
    %c24_282 = arith.constant 24 : index
    %c0_283 = arith.constant 0 : index
    %470 = vector.load %arg11[%c24_282, %c0_283] : memref<64x32xf32, #tpu.memory_space<vmem>>, vector<8x32xf32>
    tpu.vector_store %arg11[%c24_282, %c0_283], %469 {strides = array<i32>} : memref<64x32xf32, #tpu.memory_space<vmem>>, vector<8x32xf32>,
    %c32_284 = arith.constant 32 : index
    %c0_285 = arith.constant 0 : index
    %471 = vector.load %arg10[%c32_284, %c0_285] : memref<64x128xf32, #tpu.memory_space<vmem>>, vector<8x128xf32>
    %cst_286 = arith.constant dense<0.000000e+00> : vector<8x128xf32>
    %472 = tpu.matmul %469, %392, %cst_286 {dimension_numbers = #tpu.dot_dimension_numbers<[1], [0], [0], [1], [0, 0, 1, 1], [], []>} : vector<8x32xf32>, vector<32x128xf32>, vector<8x128xf32> -> vector<8x128xf32>
    %473 = arith.addf %471, %472 : vector<8x128xf32>
    %474 = arith.negf %473 : vector<8x128xf32>
    %475 = math.exp %474 : vector<8x128xf32>
    %cst_287 = arith.constant 1.000000e+00 : f32
    %476 = vector.broadcast %cst_287 : f32 to vector<8x128xf32>
    %477 = arith.addf %476, %475 : vector<8x128xf32>
    %478 = arith.divf %476, %477 : vector<8x128xf32>
    %479 = vector.extract_strided_slice %478 {offsets = [0, 0], sizes = [8, 32], strides = [1, 1]} : vector<8x128xf32> to vector<8x32xf32>
    %480 = vector.extract_strided_slice %478 {offsets = [0, 32], sizes = [8, 32], strides = [1, 1]} : vector<8x128xf32> to vector<8x32xf32>
    %481 = vector.extract_strided_slice %473 {offsets = [0, 64], sizes = [8, 32], strides = [1, 1]} : vector<8x128xf32> to vector<8x32xf32>
    %482 = math.tanh %481 : vector<8x32xf32>
    %483 = vector.extract_strided_slice %478 {offsets = [0, 96], sizes = [8, 32], strides = [1, 1]} : vector<8x128xf32> to vector<8x32xf32>
    %484 = arith.mulf %480, %467 : vector<8x32xf32>
    %485 = arith.mulf %479, %482 : vector<8x32xf32>
    %486 = arith.addf %484, %485 : vector<8x32xf32>
    %487 = math.tanh %486 : vector<8x32xf32>
    %488 = arith.mulf %483, %487 : vector<8x32xf32>
    %c32_288 = arith.constant 32 : index
    %c0_289 = arith.constant 0 : index
    %489 = vector.load %arg11[%c32_288, %c0_289] : memref<64x32xf32, #tpu.memory_space<vmem>>, vector<8x32xf32>
    tpu.vector_store %arg11[%c32_288, %c0_289], %488 {strides = array<i32>} : memref<64x32xf32, #tpu.memory_space<vmem>>, vector<8x32xf32>,
    %c40_290 = arith.constant 40 : index
    %c0_291 = arith.constant 0 : index
    %490 = vector.load %arg10[%c40_290, %c0_291] : memref<64x128xf32, #tpu.memory_space<vmem>>, vector<8x128xf32>
    %cst_292 = arith.constant dense<0.000000e+00> : vector<8x128xf32>
    %491 = tpu.matmul %488, %392, %cst_292 {dimension_numbers = #tpu.dot_dimension_numbers<[1], [0], [0], [1], [0, 0, 1, 1], [], []>} : vector<8x32xf32>, vector<32x128xf32>, vector<8x128xf32> -> vector<8x128xf32>
    %492 = arith.addf %490, %491 : vector<8x128xf32>
    %493 = arith.negf %492 : vector<8x128xf32>
    %494 = math.exp %493 : vector<8x128xf32>
    %cst_293 = arith.constant 1.000000e+00 : f32
    %495 = vector.broadcast %cst_293 : f32 to vector<8x128xf32>
    %496 = arith.addf %495, %494 : vector<8x128xf32>
    %497 = arith.divf %495, %496 : vector<8x128xf32>
    %498 = vector.extract_strided_slice %497 {offsets = [0, 0], sizes = [8, 32], strides = [1, 1]} : vector<8x128xf32> to vector<8x32xf32>
    %499 = vector.extract_strided_slice %497 {offsets = [0, 32], sizes = [8, 32], strides = [1, 1]} : vector<8x128xf32> to vector<8x32xf32>
    %500 = vector.extract_strided_slice %492 {offsets = [0, 64], sizes = [8, 32], strides = [1, 1]} : vector<8x128xf32> to vector<8x32xf32>
    %501 = math.tanh %500 : vector<8x32xf32>
    %502 = vector.extract_strided_slice %497 {offsets = [0, 96], sizes = [8, 32], strides = [1, 1]} : vector<8x128xf32> to vector<8x32xf32>
    %503 = arith.mulf %499, %486 : vector<8x32xf32>
    %504 = arith.mulf %498, %501 : vector<8x32xf32>
    %505 = arith.addf %503, %504 : vector<8x32xf32>
    %506 = math.tanh %505 : vector<8x32xf32>
    %507 = arith.mulf %502, %506 : vector<8x32xf32>
    %c40_294 = arith.constant 40 : index
    %c0_295 = arith.constant 0 : index
    %508 = vector.load %arg11[%c40_294, %c0_295] : memref<64x32xf32, #tpu.memory_space<vmem>>, vector<8x32xf32>
    tpu.vector_store %arg11[%c40_294, %c0_295], %507 {strides = array<i32>} : memref<64x32xf32, #tpu.memory_space<vmem>>, vector<8x32xf32>,
    %c48_296 = arith.constant 48 : index
    %c0_297 = arith.constant 0 : index
    %509 = vector.load %arg10[%c48_296, %c0_297] : memref<64x128xf32, #tpu.memory_space<vmem>>, vector<8x128xf32>
    %cst_298 = arith.constant dense<0.000000e+00> : vector<8x128xf32>
    %510 = tpu.matmul %507, %392, %cst_298 {dimension_numbers = #tpu.dot_dimension_numbers<[1], [0], [0], [1], [0, 0, 1, 1], [], []>} : vector<8x32xf32>, vector<32x128xf32>, vector<8x128xf32> -> vector<8x128xf32>
    %511 = arith.addf %509, %510 : vector<8x128xf32>
    %512 = arith.negf %511 : vector<8x128xf32>
    %513 = math.exp %512 : vector<8x128xf32>
    %cst_299 = arith.constant 1.000000e+00 : f32
    %514 = vector.broadcast %cst_299 : f32 to vector<8x128xf32>
    %515 = arith.addf %514, %513 : vector<8x128xf32>
    %516 = arith.divf %514, %515 : vector<8x128xf32>
    %517 = vector.extract_strided_slice %516 {offsets = [0, 0], sizes = [8, 32], strides = [1, 1]} : vector<8x128xf32> to vector<8x32xf32>
    %518 = vector.extract_strided_slice %516 {offsets = [0, 32], sizes = [8, 32], strides = [1, 1]} : vector<8x128xf32> to vector<8x32xf32>
    %519 = vector.extract_strided_slice %511 {offsets = [0, 64], sizes = [8, 32], strides = [1, 1]} : vector<8x128xf32> to vector<8x32xf32>
    %520 = math.tanh %519 : vector<8x32xf32>
    %521 = vector.extract_strided_slice %516 {offsets = [0, 96], sizes = [8, 32], strides = [1, 1]} : vector<8x128xf32> to vector<8x32xf32>
    %522 = arith.mulf %518, %505 : vector<8x32xf32>
    %523 = arith.mulf %517, %520 : vector<8x32xf32>
    %524 = arith.addf %522, %523 : vector<8x32xf32>
    %525 = math.tanh %524 : vector<8x32xf32>
    %526 = arith.mulf %521, %525 : vector<8x32xf32>
    %c48_300 = arith.constant 48 : index
    %c0_301 = arith.constant 0 : index
    %527 = vector.load %arg11[%c48_300, %c0_301] : memref<64x32xf32, #tpu.memory_space<vmem>>, vector<8x32xf32>
    tpu.vector_store %arg11[%c48_300, %c0_301], %526 {strides = array<i32>} : memref<64x32xf32, #tpu.memory_space<vmem>>, vector<8x32xf32>,
    %c56_302 = arith.constant 56 : index
    %c0_303 = arith.constant 0 : index
    %528 = vector.load %arg10[%c56_302, %c0_303] : memref<64x128xf32, #tpu.memory_space<vmem>>, vector<8x128xf32>
    %cst_304 = arith.constant dense<0.000000e+00> : vector<8x128xf32>
    %529 = tpu.matmul %526, %392, %cst_304 {dimension_numbers = #tpu.dot_dimension_numbers<[1], [0], [0], [1], [0, 0, 1, 1], [], []>} : vector<8x32xf32>, vector<32x128xf32>, vector<8x128xf32> -> vector<8x128xf32>
    %530 = arith.addf %528, %529 : vector<8x128xf32>
    %531 = arith.negf %530 : vector<8x128xf32>
    %532 = math.exp %531 : vector<8x128xf32>
    %cst_305 = arith.constant 1.000000e+00 : f32
    %533 = vector.broadcast %cst_305 : f32 to vector<8x128xf32>
    %534 = arith.addf %533, %532 : vector<8x128xf32>
    %535 = arith.divf %533, %534 : vector<8x128xf32>
    %536 = vector.extract_strided_slice %535 {offsets = [0, 0], sizes = [8, 32], strides = [1, 1]} : vector<8x128xf32> to vector<8x32xf32>
    %537 = vector.extract_strided_slice %535 {offsets = [0, 32], sizes = [8, 32], strides = [1, 1]} : vector<8x128xf32> to vector<8x32xf32>
    %538 = vector.extract_strided_slice %530 {offsets = [0, 64], sizes = [8, 32], strides = [1, 1]} : vector<8x128xf32> to vector<8x32xf32>
    %539 = math.tanh %538 : vector<8x32xf32>
    %540 = vector.extract_strided_slice %535 {offsets = [0, 96], sizes = [8, 32], strides = [1, 1]} : vector<8x128xf32> to vector<8x32xf32>
    %541 = arith.mulf %537, %524 : vector<8x32xf32>
    %542 = arith.mulf %536, %539 : vector<8x32xf32>
    %543 = arith.addf %541, %542 : vector<8x32xf32>
    %544 = math.tanh %543 : vector<8x32xf32>
    %545 = arith.mulf %540, %544 : vector<8x32xf32>
    %c56_306 = arith.constant 56 : index
    %c0_307 = arith.constant 0 : index
    %546 = vector.load %arg11[%c56_306, %c0_307] : memref<64x32xf32, #tpu.memory_space<vmem>>, vector<8x32xf32>
    tpu.vector_store %arg11[%c56_306, %c0_307], %545 {strides = array<i32>} : memref<64x32xf32, #tpu.memory_space<vmem>>, vector<8x32xf32>,
    %c0_308 = arith.constant 0 : index
    %c0_309 = arith.constant 0 : index
    %547 = vector.load %arg11[%c0_308, %c0_309] : memref<64x32xf32, #tpu.memory_space<vmem>>, vector<64x32xf32>
    %c0_310 = arith.constant 0 : index
    %c0_311 = arith.constant 0 : index
    %548 = vector.load %arg6[%c0_310, %c0_311] : memref<32x128xf32, #tpu.memory_space<vmem>>, vector<32x128xf32>
    %cst_312 = arith.constant dense<0.000000e+00> : vector<64x128xf32>
    %549 = tpu.matmul %547, %548, %cst_312 {dimension_numbers = #tpu.dot_dimension_numbers<[1], [0], [0], [1], [0, 0, 1, 1], [], []>} : vector<64x32xf32>, vector<32x128xf32>, vector<64x128xf32> -> vector<64x128xf32>
    %c0_313 = arith.constant 0 : index
    %c0_314 = arith.constant 0 : index
    %550 = vector.load %arg7[%c0_313, %c0_314] : memref<1x128xf32, #tpu.memory_space<vmem>>, vector<1x128xf32>
    %551 = vector.broadcast %550 : vector<1x128xf32> to vector<64x128xf32>
    %552 = arith.addf %549, %551 : vector<64x128xf32>
    %cst_315 = arith.constant dense<0xFF800000> : vector<64xf32>
    %553 = vector.multi_reduction <maximumf>, %552, %cst_315 [1] : vector<64x128xf32> to vector<64xf32>
    %554 = vector.shape_cast %553 : vector<64xf32> to vector<64x1xf32>
    %555 = vector.broadcast %554 : vector<64x1xf32> to vector<64x128xf32>
    %556 = arith.subf %552, %555 : vector<64x128xf32>
    %557 = math.exp %556 : vector<64x128xf32>
    %cst_316 = arith.constant dense<0.000000e+00> : vector<64xf32>
    %558 = vector.multi_reduction <add>, %557, %cst_316 [1] : vector<64x128xf32> to vector<64xf32>
    %559 = vector.shape_cast %558 : vector<64xf32> to vector<64x1xf32>
    %560 = math.log %559 : vector<64x1xf32>
    %561 = vector.broadcast %560 : vector<64x1xf32> to vector<64x128xf32>
    %562 = arith.subf %556, %561 : vector<64x128xf32>
    %563 = vector.shape_cast %562 : vector<64x128xf32> to vector<8x8x128xf32>
    %c0_317 = arith.constant 0 : index
    %c0_318 = arith.constant 0 : index
    %c0_319 = arith.constant 0 : index
    %564 = vector.load %arg8[%c0_317, %c0_318, %c0_319] : memref<8x8x128xf32, #tpu.memory_space<vmem>>, vector<8x8x128xf32>
    tpu.vector_store %arg8[%c0_317, %c0_318, %c0_319], %563 {strides = array<i32>} : memref<8x8x128xf32, #tpu.memory_space<vmem>>, vector<8x8x128xf32>,
    return
  }
  func.func @transform_0(%arg0: i32) -> (i32, i32) {
    %c0_i32 = arith.constant 0 : i32
    %c0_i32_0 = arith.constant 0 : i32
    %c0_i32_1 = arith.constant 0 : i32
    return %c0_i32, %c0_i32_0 : i32, i32
  }
  func.func @transform_1(%arg0: i32) -> (i32, i32) {
    %c0_i32 = arith.constant 0 : i32
    %c0_i32_0 = arith.constant 0 : i32
    %c0_i32_1 = arith.constant 0 : i32
    return %c0_i32, %c0_i32_0 : i32, i32
  }
  func.func @transform_2(%arg0: i32) -> (i32, i32) {
    %c0_i32 = arith.constant 0 : i32
    %c0_i32_0 = arith.constant 0 : i32
    %c0_i32_1 = arith.constant 0 : i32
    return %c0_i32, %c0_i32_0 : i32, i32
  }
  func.func @transform_3(%arg0: i32) -> (i32, i32) {
    %c0_i32 = arith.constant 0 : i32
    %c0_i32_0 = arith.constant 0 : i32
    %c0_i32_1 = arith.constant 0 : i32
    return %c0_i32, %c0_i32_0 : i32, i32
  }
  func.func @transform_4(%arg0: i32) -> (i32, i32) {
    %c0_i32 = arith.constant 0 : i32
    %c0_i32_0 = arith.constant 0 : i32
    %c0_i32_1 = arith.constant 0 : i32
    return %c0_i32, %c0_i32_0 : i32, i32
  }
  func.func @transform_5(%arg0: i32) -> (i32, i32) {
    %c0_i32 = arith.constant 0 : i32
    %c0_i32_0 = arith.constant 0 : i32
    %c0_i32_1 = arith.constant 0 : i32
    return %c0_i32, %c0_i32_0 : i32, i32
  }
  func.func @transform_6(%arg0: i32) -> (i32, i32) {
    %c0_i32 = arith.constant 0 : i32
    %c0_i32_0 = arith.constant 0 : i32
    %c0_i32_1 = arith.constant 0 : i32
    return %c0_i32, %c0_i32_0 : i32, i32
  }
  func.func @transform_7(%arg0: i32) -> (i32, i32, i32) {
    %c0_i32 = arith.constant 0 : i32
    %c0_i32_0 = arith.constant 0 : i32
    %c0_i32_1 = arith.constant 0 : i32
    return %c0_i32, %arg0, %c0_i32_0 : i32, i32, i32
  }
}

</mosaic_0001>

<llo_original>
// kernel: tpu_custom_call.1
$region0: #{tpu_custom_call.1}
  #allocation0 [shape = 'u32[]', space=smem, size = 0x4, offset = 0x4, fixed_abs, tag = 'smem constant byte address 0x4 - core index']
  #allocation1 [shape = 'u32[72,128]{1,0:T(1,128)}', space=vmem, size = 0x9000, scoped, tag = 'internal scratch']
  #allocation2 [shape = 'f32[64,128]{1,0:T(8,128)}', space=vmem, size = 0x8000, scoped, tag = 'scratch operand']
  #allocation3 [shape = 'f32[64,128]{1,0:T(8,128)}', space=vmem, size = 0x8000, scoped, tag = 'scratch operand']
  #allocation4 [shape = 'f32[64,32]{1,0:T(8,128)}', space=vmem, size = 0x8000, scoped, tag = 'scratch operand']
  %s0 = inlined_call_operand.hbm [shape: s32[8,8], index: 0, kind: input, shape index: {}]
  %s1 = inlined_call_operand.hbm [shape: f32[50,128], index: 1, kind: input, shape index: {}]
  %s2 = inlined_call_operand.hbm [shape: f32[128,128], index: 2, kind: input, shape index: {}]
  %s3 = inlined_call_operand.hbm [shape: f32[32,128], index: 3, kind: input, shape index: {}]
  %s4 = inlined_call_operand.vmem [shape: f32[1,128], index: 4, kind: input, shape index: {}]
  %s5 = inlined_call_operand.hbm [shape: f32[32,128], index: 5, kind: input, shape index: {}]
  %s6 = inlined_call_operand.vmem [shape: f32[1,128], index: 6, kind: input, shape index: {}]
  %s7 = inlined_call_operand.hbm [shape: f32[8,8,128], index: 7, kind: output, shape index: {}]
  %s8 = sld [smem:[#allocation0]]
  $region58: #{tpu_custom_call.1} parent=0
    _
  %s10 = ssub.s32 1, %s8
  %s11 = scalar_select 0, %s10, %s8
  $region1: #{tpu_custom_call.1} parent=0
    #allocation5 [shape = 'u8[4096]{0}', space=smem, size = 0x1000, scoped, tag = 'input window, operand 0, single buffered']
    #allocation6 [shape = 's32[1]{0}', space=sflag, size = 0x4, scoped, tag = 'scoped memory for tpu_custom_call.1']
    #allocation7 [shape = 's32[1]{0}', space=sflag, size = 0x4, scoped, tag = 'scoped memory for tpu_custom_call.1']
    #allocation8 [shape = 's32[1]{0}', space=sflag, size = 0x4, scoped, tag = 'scoped memory for tpu_custom_call.1']
    #allocation9 [shape = 'u8[28672]{0}', space=vmem, size = 0x7000, scoped, tag = 'input window, operand 1, single buffered']
    #allocation10 [shape = 'u8[65536]{0}', space=vmem, size = 0x10000, scoped, tag = 'input window, operand 2, single buffered']
    #allocation11 [shape = 's32[1]{0}', space=sflag, size = 0x4, scoped, tag = 'scoped memory for tpu_custom_call.1']
    #allocation12 [shape = 'u8[16384]{0}', space=vmem, size = 0x4000, scoped, tag = 'input window, operand 3, single buffered']
    #allocation13 [shape = 'u8[16384]{0}', space=vmem, size = 0x4000, scoped, tag = 'input window, operand 5, single buffered']
    #allocation14 [shape = 's32[1]{0}', space=sflag, size = 0x4, scoped, tag = 'scoped memory for tpu_custom_call.1']
    #allocation15 [shape = 'u8[32768]{0}', space=vmem, size = 0x8000, scoped, tag = 'output window, operand 0, single buffered']
    %12 = vsyncpa [#allocation8], 0
    %13 = vsyncpa [#allocation6], 0
    %14 = vsyncpa [#allocation11], 0
    %15 = vsyncpa [#allocation14], 0
    %16 = vsyncpa [#allocation7], 0
    // Predicated region
    $region2: #{tpu_custom_call.1} parent=1 // pred_check
      _
    $region3: #{tpu_custom_call.1} parent=1 // pred_check_branch
      %18 = sbr.rel (0) target = $region5
    $region4: #{tpu_custom_call.1} parent=1 // pred_region
      %20 = vsyncadd [#allocation8], 0
      %s22 = sshll.u32 %s0, 4
      %s23 = int_to_ptr.hbm [resolvable:$true] %s22
      %25 = dma.hbm_to_smem %s23, 128, [#allocation5], [#allocation8]
    $region5: #{tpu_custom_call.1} parent=1 // pred_fallthru
      _
    // Predicated region
    $region6: #{tpu_custom_call.1} parent=1 // pred_check
      _
    $region7: #{tpu_custom_call.1} parent=1 // pred_check_branch
      %27 = sbr.rel (0) target = $region9
    $region8: #{tpu_custom_call.1} parent=1 // pred_region
      %29 = vsyncadd [#allocation6], 0
      %s30 = sshll.u32 %s1, 4
      %s31 = int_to_ptr.hbm [resolvable:$true] %s30
      %s32 = sshll.u32 [#allocation9], 4
      %s33 = int_to_ptr.vmem [resolvable:$true] %s32
      %38 = dma.hbm_to_vmem [thread:$0]  %s31, 896, %s33, [#allocation6], 128, 128, 8
    $region9: #{tpu_custom_call.1} parent=1 // pred_fallthru
      _
    // Predicated region
    $region10: #{tpu_custom_call.1} parent=1 // pred_check
      _
    $region11: #{tpu_custom_call.1} parent=1 // pred_check_branch
      %40 = sbr.rel (0) target = $region13
    $region12: #{tpu_custom_call.1} parent=1 // pred_region
      %42 = vsyncadd [#allocation11], 0
      %s43 = sshll.u32 %s2, 4
      %s44 = int_to_ptr.hbm [resolvable:$true] %s43
      %s45 = sshll.u32 [#allocation10], 4
      %s46 = int_to_ptr.vmem [resolvable:$true] %s45
      %51 = dma.hbm_to_vmem [thread:$0]  %s44, 2048, %s46, [#allocation11], 128, 128, 8
    $region13: #{tpu_custom_call.1} parent=1 // pred_fallthru
      _
    // Predicated region
    $region14: #{tpu_custom_call.1} parent=1 // pred_check
      _
    $region15: #{tpu_custom_call.1} parent=1 // pred_check_branch
      %53 = sbr.rel (0) target = $region17
    $region16: #{tpu_custom_call.1} parent=1 // pred_region
      %55 = vsyncadd [#allocation11], 0
      %s56 = sshll.u32 %s3, 4
      %s57 = int_to_ptr.hbm [resolvable:$true] %s56
      %s58 = sshll.u32 [#allocation12], 4
      %s59 = int_to_ptr.vmem [resolvable:$true] %s58
      %64 = dma.hbm_to_vmem [thread:$0]  %s57, 512, %s59, [#allocation11], 128, 128, 8
    $region17: #{tpu_custom_call.1} parent=1 // pred_fallthru
      _
    // Predicated region
    $region18: #{tpu_custom_call.1} parent=1 // pred_check
      _
    $region19: #{tpu_custom_call.1} parent=1 // pred_check_branch
      %66 = sbr.rel (0) target = $region21
    $region20: #{tpu_custom_call.1} parent=1 // pred_region
      _
    $region21: #{tpu_custom_call.1} parent=1 // pred_fallthru
      _
    // Predicated region
    $region22: #{tpu_custom_call.1} parent=1 // pred_check
      _
    $region23: #{tpu_custom_call.1} parent=1 // pred_check_branch
      %68 = sbr.rel (0) target = $region25
    $region24: #{tpu_custom_call.1} parent=1 // pred_region
      %70 = vsyncadd [#allocation14], 0
      %s71 = sshll.u32 %s5, 4
      %s72 = int_to_ptr.hbm [resolvable:$true] %s71
      %s73 = sshll.u32 [#allocation13], 4
      %s74 = int_to_ptr.vmem [resolvable:$true] %s73
      %79 = dma.hbm_to_vmem [thread:$0]  %s72, 512, %s74, [#allocation14], 128, 128, 8
    $region25: #{tpu_custom_call.1} parent=1 // pred_fallthru
      _
    // Predicated region
    $region26: #{tpu_custom_call.1} parent=1 // pred_check
      _
    $region27: #{tpu_custom_call.1} parent=1 // pred_check_branch
      %81 = sbr.rel (0) target = $region29
    $region28: #{tpu_custom_call.1} parent=1 // pred_region
      _
    $region29: #{tpu_custom_call.1} parent=1 // pred_fallthru
      _
    // Predicated region
    $region30: #{tpu_custom_call.1} parent=1 // pred_check
      _
    $region31: #{tpu_custom_call.1} parent=1 // pred_check_branch
      %83 = sbr.rel (0) target = $region33
    $region32: #{tpu_custom_call.1} parent=1 // pred_region
      %85 = dma.done [#allocation8], 128
    $region33: #{tpu_custom_call.1} parent=1 // pred_fallthru
      _
    // Predicated region
    $region34: #{tpu_custom_call.1} parent=1 // pred_check
      _
    $region35: #{tpu_custom_call.1} parent=1 // pred_check_branch
      %87 = sbr.rel (0) target = $region37
    $region36: #{tpu_custom_call.1} parent=1 // pred_region
      %89 = dma.done [#allocation6], 896
    $region37: #{tpu_custom_call.1} parent=1 // pred_fallthru
      _
    // Predicated region
    $region38: #{tpu_custom_call.1} parent=1 // pred_check
      _
    $region39: #{tpu_custom_call.1} parent=1 // pred_check_branch
      %91 = sbr.rel (0) target = $region41
    $region40: #{tpu_custom_call.1} parent=1 // pred_region
      %93 = dma.done [#allocation11], 2048
    $region41: #{tpu_custom_call.1} parent=1 // pred_fallthru
      _
    // Predicated region
    $region42: #{tpu_custom_call.1} parent=1 // pred_check
      _
    $region43: #{tpu_custom_call.1} parent=1 // pred_check_branch
      %95 = sbr.rel (0) target = $region45
    $region44: #{tpu_custom_call.1} parent=1 // pred_region
      %97 = dma.done [#allocation11], 512
    $region45: #{tpu_custom_call.1} parent=1 // pred_fallthru
      _
    // Predicated region
    $region46: #{tpu_custom_call.1} parent=1 // pred_check
      _
    $region47: #{tpu_custom_call.1} parent=1 // pred_check_branch
      %99 = sbr.rel (0) target = $region49
    $region48: #{tpu_custom_call.1} parent=1 // pred_region
      %101 = dma.done [#allocation14], 512
    $region49: #{tpu_custom_call.1} parent=1 // pred_fallthru
      _
    %102 = sfence
    %s103 = smul.u32 0, 8
    %s104 = smul.u32 %s103, 128
    %s105 = sld [smem:[#allocation5 + %s104]]
    %s106 = scalar_lea.vmem [#allocation9], %s105
    %v107 = vld [vmem:[%s106] sm:$0x1]
    %108 = vst [vmem:[#allocation2] sm:$0x1] %v107
    %s109 = sadd.s32 %s103, 1
    %s110 = smul.u32 %s109, 128
    %s111 = sld [smem:[#allocation5 + %s110]]
    %s112 = scalar_lea.vmem [#allocation9], %s111
    %v113 = vld [vmem:[%s112] sm:$0x1]
    %114 = vst [vmem:[#allocation2 + $0x1] sm:$0x1] %v113
    %s115 = sadd.s32 %s103, 2
    %s116 = smul.u32 %s115, 128
    %s117 = sld [smem:[#allocation5 + %s116]]
    %s118 = scalar_lea.vmem [#allocation9], %s117
    %v119 = vld [vmem:[%s118] sm:$0x1]
    %120 = vst [vmem:[#allocation2 + $0x2] sm:$0x1] %v119
    %s121 = sadd.s32 %s103, 3
    %s122 = smul.u32 %s121, 128
    %s123 = sld [smem:[#allocation5 + %s122]]
    %s124 = scalar_lea.vmem [#allocation9], %s123
    %v125 = vld [vmem:[%s124] sm:$0x1]
    %126 = vst [vmem:[#allocation2 + $0x3] sm:$0x1] %v125
    %s127 = sadd.s32 %s103, 4
    %s128 = smul.u32 %s127, 128
    %s129 = sld [smem:[#allocation5 + %s128]]
    %s130 = scalar_lea.vmem [#allocation9], %s129
    %v131 = vld [vmem:[%s130] sm:$0x1]
    %132 = vst [vmem:[#allocation2 + $0x4] sm:$0x1] %v131
    %s133 = sadd.s32 %s103, 5
    %s134 = smul.u32 %s133, 128
    %s135 = sld [smem:[#allocation5 + %s134]]
    %s136 = scalar_lea.vmem [#allocation9], %s135
    %v137 = vld [vmem:[%s136] sm:$0x1]
    %138 = vst [vmem:[#allocation2 + $0x5] sm:$0x1] %v137
    %s139 = sadd.s32 %s103, 6
    %s140 = smul.u32 %s139, 128
    %s141 = sld [smem:[#allocation5 + %s140]]
    %s142 = scalar_lea.vmem [#allocation9], %s141
    %v143 = vld [vmem:[%s142] sm:$0x1]
    %144 = vst [vmem:[#allocation2 + $0x6] sm:$0x1] %v143
    %s145 = sadd.s32 %s103, 7
    %s146 = smul.u32 %s145, 128
    %s147 = sld [smem:[#allocation5 + %s146]]
    %s148 = scalar_lea.vmem [#allocation9], %s147
    %v149 = vld [vmem:[%s148] sm:$0x1]
    %150 = vst [vmem:[#allocation2 + $0x7] sm:$0x1] %v149
    %s151 = sadd.s32 %s104, 1
    %s152 = sld [smem:[#allocation5 + %s151]]
    %s153 = scalar_lea.vmem [#allocation9], %s152
    %v154 = vld [vmem:[%s153] sm:$0x1]
    %155 = vst [vmem:[#allocation2 + $0x8] sm:$0x1] %v154
    %s156 = sadd.s32 %s110, 1
    %s157 = sld [smem:[#allocation5 + %s156]]
    %s158 = scalar_lea.vmem [#allocation9], %s157
    %v159 = vld [vmem:[%s158] sm:$0x1]
    %160 = vst [vmem:[#allocation2 + $0x9] sm:$0x1] %v159
    %s161 = sadd.s32 %s116, 1
    %s162 = sld [smem:[#allocation5 + %s161]]
    %s163 = scalar_lea.vmem [#allocation9], %s162
    %v164 = vld [vmem:[%s163] sm:$0x1]
    %165 = vst [vmem:[#allocation2 + $0xa] sm:$0x1] %v164
    %s166 = sadd.s32 %s122, 1
    %s167 = sld [smem:[#allocation5 + %s166]]
    %s168 = scalar_lea.vmem [#allocation9], %s167
    %v169 = vld [vmem:[%s168] sm:$0x1]
    %170 = vst [vmem:[#allocation2 + $0xb] sm:$0x1] %v169
    %s171 = sadd.s32 %s128, 1
    %s172 = sld [smem:[#allocation5 + %s171]]
    %s173 = scalar_lea.vmem [#allocation9], %s172
    %v174 = vld [vmem:[%s173] sm:$0x1]
    %175 = vst [vmem:[#allocation2 + $0xc] sm:$0x1] %v174
    %s176 = sadd.s32 %s134, 1
    %s177 = sld [smem:[#allocation5 + %s176]]
    %s178 = scalar_lea.vmem [#allocation9], %s177
    %v179 = vld [vmem:[%s178] sm:$0x1]
    %180 = vst [vmem:[#allocation2 + $0xd] sm:$0x1] %v179
    %s181 = sadd.s32 %s140, 1
    %s182 = sld [smem:[#allocation5 + %s181]]
    %s183 = scalar_lea.vmem [#allocation9], %s182
    %v184 = vld [vmem:[%s183] sm:$0x1]
    %185 = vst [vmem:[#allocation2 + $0xe] sm:$0x1] %v184
    %s186 = sadd.s32 %s146, 1
    %s187 = sld [smem:[#allocation5 + %s186]]
    %s188 = scalar_lea.vmem [#allocation9], %s187
    %v189 = vld [vmem:[%s188] sm:$0x1]
    %190 = vst [vmem:[#allocation2 + $0xf] sm:$0x1] %v189
    %s191 = sadd.s32 %s104, 2
    %s192 = sld [smem:[#allocation5 + %s191]]
    %s193 = scalar_lea.vmem [#allocation9], %s192
    %v194 = vld [vmem:[%s193] sm:$0x1]
    %195 = vst [vmem:[#allocation2 + $0x10] sm:$0x1] %v194
    %s196 = sadd.s32 %s110, 2
    %s197 = sld [smem:[#allocation5 + %s196]]
    %s198 = scalar_lea.vmem [#allocation9], %s197
    %v199 = vld [vmem:[%s198] sm:$0x1]
    %200 = vst [vmem:[#allocation2 + $0x11] sm:$0x1] %v199
    %s201 = sadd.s32 %s116, 2
    %s202 = sld [smem:[#allocation5 + %s201]]
    %s203 = scalar_lea.vmem [#allocation9], %s202
    %v204 = vld [vmem:[%s203] sm:$0x1]
    %205 = vst [vmem:[#allocation2 + $0x12] sm:$0x1] %v204
    %s206 = sadd.s32 %s122, 2
    %s207 = sld [smem:[#allocation5 + %s206]]
    %s208 = scalar_lea.vmem [#allocation9], %s207
    %v209 = vld [vmem:[%s208] sm:$0x1]
    %210 = vst [vmem:[#allocation2 + $0x13] sm:$0x1] %v209
    %s211 = sadd.s32 %s128, 2
    %s212 = sld [smem:[#allocation5 + %s211]]
    %s213 = scalar_lea.vmem [#allocation9], %s212
    %v214 = vld [vmem:[%s213] sm:$0x1]
    %215 = vst [vmem:[#allocation2 + $0x14] sm:$0x1] %v214
    %s216 = sadd.s32 %s134, 2
    %s217 = sld [smem:[#allocation5 + %s216]]
    %s218 = scalar_lea.vmem [#allocation9], %s217
    %v219 = vld [vmem:[%s218] sm:$0x1]
    %220 = vst [vmem:[#allocation2 + $0x15] sm:$0x1] %v219
    %s221 = sadd.s32 %s140, 2
    %s222 = sld [smem:[#allocation5 + %s221]]
    %s223 = scalar_lea.vmem [#allocation9], %s222
    %v224 = vld [vmem:[%s223] sm:$0x1]
    %225 = vst [vmem:[#allocation2 + $0x16] sm:$0x1] %v224
    %s226 = sadd.s32 %s146, 2
    %s227 = sld [smem:[#allocation5 + %s226]]
    %s228 = scalar_lea.vmem [#allocation9], %s227
    %v229 = vld [vmem:[%s228] sm:$0x1]
    %230 = vst [vmem:[#allocation2 + $0x17] sm:$0x1] %v229
    %s231 = sadd.s32 %s104, 3
    %s232 = sld [smem:[#allocation5 + %s231]]
    %s233 = scalar_lea.vmem [#allocation9], %s232
    %v234 = vld [vmem:[%s233] sm:$0x1]
    %235 = vst [vmem:[#allocation2 + $0x18] sm:$0x1] %v234
    %s236 = sadd.s32 %s110, 3
    %s237 = sld [smem:[#allocation5 + %s236]]
    %s238 = scalar_lea.vmem [#allocation9], %s237
    %v239 = vld [vmem:[%s238] sm:$0x1]
    %240 = vst [vmem:[#allocation2 + $0x19] sm:$0x1] %v239
    %s241 = sadd.s32 %s116, 3
    %s242 = sld [smem:[#allocation5 + %s241]]
    %s243 = scalar_lea.vmem [#allocation9], %s242
    %v244 = vld [vmem:[%s243] sm:$0x1]
    %245 = vst [vmem:[#allocation2 + $0x1a] sm:$0x1] %v244
    %s246 = sadd.s32 %s122, 3
    %s247 = sld [smem:[#allocation5 + %s246]]
    %s248 = scalar_lea.vmem [#allocation9], %s247
    %v249 = vld [vmem:[%s248] sm:$0x1]
    %250 = vst [vmem:[#allocation2 + $0x1b] sm:$0x1] %v249
    %s251 = sadd.s32 %s128, 3
    %s252 = sld [smem:[#allocation5 + %s251]]
    %s253 = scalar_lea.vmem [#allocation9], %s252
    %v254 = vld [vmem:[%s253] sm:$0x1]
    %255 = vst [vmem:[#allocation2 + $0x1c] sm:$0x1] %v254
    %s256 = sadd.s32 %s134, 3
    %s257 = sld [smem:[#allocation5 + %s256]]
    %s258 = scalar_lea.vmem [#allocation9], %s257
    %v259 = vld [vmem:[%s258] sm:$0x1]
    %260 = vst [vmem:[#allocation2 + $0x1d] sm:$0x1] %v259
    %s261 = sadd.s32 %s140, 3
    %s262 = sld [smem:[#allocation5 + %s261]]
    %s263 = scalar_lea.vmem [#allocation9], %s262
    %v264 = vld [vmem:[%s263] sm:$0x1]
    %265 = vst [vmem:[#allocation2 + $0x1e] sm:$0x1] %v264
    %s266 = sadd.s32 %s146, 3
    %s267 = sld [smem:[#allocation5 + %s266]]
    %s268 = scalar_lea.vmem [#allocation9], %s267
    %v269 = vld [vmem:[%s268] sm:$0x1]
    %270 = vst [vmem:[#allocation2 + $0x1f] sm:$0x1] %v269
    %s271 = sadd.s32 %s104, 4
    %s272 = sld [smem:[#allocation5 + %s271]]
    %s273 = scalar_lea.vmem [#allocation9], %s272
    %v274 = vld [vmem:[%s273] sm:$0x1]
    %275 = vst [vmem:[#allocation2 + $0x20] sm:$0x1] %v274
    %s276 = sadd.s32 %s110, 4
    %s277 = sld [smem:[#allocation5 + %s276]]
    %s278 = scalar_lea.vmem [#allocation9], %s277
    %v279 = vld [vmem:[%s278] sm:$0x1]
    %280 = vst [vmem:[#allocation2 + $0x21] sm:$0x1] %v279
    %s281 = sadd.s32 %s116, 4
    %s282 = sld [smem:[#allocation5 + %s281]]
    %s283 = scalar_lea.vmem [#allocation9], %s282
    %v284 = vld [vmem:[%s283] sm:$0x1]
    %285 = vst [vmem:[#allocation2 + $0x22] sm:$0x1] %v284
    %s286 = sadd.s32 %s122, 4
    %s287 = sld [smem:[#allocation5 + %s286]]
    %s288 = scalar_lea.vmem [#allocation9], %s287
    %v289 = vld [vmem:[%s288] sm:$0x1]
    %290 = vst [vmem:[#allocation2 + $0x23] sm:$0x1] %v289
    %s291 = sadd.s32 %s128, 4
    %s292 = sld [smem:[#allocation5 + %s291]]
    %s293 = scalar_lea.vmem [#allocation9], %s292
    %v294 = vld [vmem:[%s293] sm:$0x1]
    %295 = vst [vmem:[#allocation2 + $0x24] sm:$0x1] %v294
    %s296 = sadd.s32 %s134, 4
    %s297 = sld [smem:[#allocation5 + %s296]]
    %s298 = scalar_lea.vmem [#allocation9], %s297
    %v299 = vld [vmem:[%s298] sm:$0x1]
    %300 = vst [vmem:[#allocation2 + $0x25] sm:$0x1] %v299
    %s301 = sadd.s32 %s140, 4
    %s302 = sld [smem:[#allocation5 + %s301]]
    %s303 = scalar_lea.vmem [#allocation9], %s302
    %v304 = vld [vmem:[%s303] sm:$0x1]
    %305 = vst [vmem:[#allocation2 + $0x26] sm:$0x1] %v304
    %s306 = sadd.s32 %s146, 4
    %s307 = sld [smem:[#allocation5 + %s306]]
    %s308 = scalar_lea.vmem [#allocation9], %s307
    %v309 = vld [vmem:[%s308] sm:$0x1]
    %310 = vst [vmem:[#allocation2 + $0x27] sm:$0x1] %v309
    %s311 = sadd.s32 %s104, 5
    %s312 = sld [smem:[#allocation5 + %s311]]
    %s313 = scalar_lea.vmem [#allocation9], %s312
    %v314 = vld [vmem:[%s313] sm:$0x1]
    %315 = vst [vmem:[#allocation2 + $0x28] sm:$0x1] %v314
    %s316 = sadd.s32 %s110, 5
    %s317 = sld [smem:[#allocation5 + %s316]]
    %s318 = scalar_lea.vmem [#allocation9], %s317
    %v319 = vld [vmem:[%s318] sm:$0x1]
    %320 = vst [vmem:[#allocation2 + $0x29] sm:$0x1] %v319
    %s321 = sadd.s32 %s116, 5
    %s322 = sld [smem:[#allocation5 + %s321]]
    %s323 = scalar_lea.vmem [#allocation9], %s322
    %v324 = vld [vmem:[%s323] sm:$0x1]
    %325 = vst [vmem:[#allocation2 + $0x2a] sm:$0x1] %v324
    %s326 = sadd.s32 %s122, 5
    %s327 = sld [smem:[#allocation5 + %s326]]
    %s328 = scalar_lea.vmem [#allocation9], %s327
    %v329 = vld [vmem:[%s328] sm:$0x1]
    %330 = vst [vmem:[#allocation2 + $0x2b] sm:$0x1] %v329
    %s331 = sadd.s32 %s128, 5
    %s332 = sld [smem:[#allocation5 + %s331]]
    %s333 = scalar_lea.vmem [#allocation9], %s332
    %v334 = vld [vmem:[%s333] sm:$0x1]
    %335 = vst [vmem:[#allocation2 + $0x2c] sm:$0x1] %v334
    %s336 = sadd.s32 %s134, 5
    %s337 = sld [smem:[#allocation5 + %s336]]
    %s338 = scalar_lea.vmem [#allocation9], %s337
    %v339 = vld [vmem:[%s338] sm:$0x1]
    %340 = vst [vmem:[#allocation2 + $0x2d] sm:$0x1] %v339
    %s341 = sadd.s32 %s140, 5
    %s342 = sld [smem:[#allocation5 + %s341]]
    %s343 = scalar_lea.vmem [#allocation9], %s342
    %v344 = vld [vmem:[%s343] sm:$0x1]
    %345 = vst [vmem:[#allocation2 + $0x2e] sm:$0x1] %v344
    %s346 = sadd.s32 %s146, 5
    %s347 = sld [smem:[#allocation5 + %s346]]
    %s348 = scalar_lea.vmem [#allocation9], %s347
    %v349 = vld [vmem:[%s348] sm:$0x1]
    %350 = vst [vmem:[#allocation2 + $0x2f] sm:$0x1] %v349
    %s351 = sadd.s32 %s104, 6
    %s352 = sld [smem:[#allocation5 + %s351]]
    %s353 = scalar_lea.vmem [#allocation9], %s352
    %v354 = vld [vmem:[%s353] sm:$0x1]
    %355 = vst [vmem:[#allocation2 + $0x30] sm:$0x1] %v354
    %s356 = sadd.s32 %s110, 6
    %s357 = sld [smem:[#allocation5 + %s356]]
    %s358 = scalar_lea.vmem [#allocation9], %s357
    %v359 = vld [vmem:[%s358] sm:$0x1]
    %360 = vst [vmem:[#allocation2 + $0x31] sm:$0x1] %v359
    %s361 = sadd.s32 %s116, 6
    %s362 = sld [smem:[#allocation5 + %s361]]
    %s363 = scalar_lea.vmem [#allocation9], %s362
    %v364 = vld [vmem:[%s363] sm:$0x1]
    %365 = vst [vmem:[#allocation2 + $0x32] sm:$0x1] %v364
    %s366 = sadd.s32 %s122, 6
    %s367 = sld [smem:[#allocation5 + %s366]]
    %s368 = scalar_lea.vmem [#allocation9], %s367
    %v369 = vld [vmem:[%s368] sm:$0x1]
    %370 = vst [vmem:[#allocation2 + $0x33] sm:$0x1] %v369
    %s371 = sadd.s32 %s128, 6
    %s372 = sld [smem:[#allocation5 + %s371]]
    %s373 = scalar_lea.vmem [#allocation9], %s372
    %v374 = vld [vmem:[%s373] sm:$0x1]
    %375 = vst [vmem:[#allocation2 + $0x34] sm:$0x1] %v374
    %s376 = sadd.s32 %s134, 6
    %s377 = sld [smem:[#allocation5 + %s376]]
    %s378 = scalar_lea.vmem [#allocation9], %s377
    %v379 = vld [vmem:[%s378] sm:$0x1]
    %380 = vst [vmem:[#allocation2 + $0x35] sm:$0x1] %v379
    %s381 = sadd.s32 %s140, 6
    %s382 = sld [smem:[#allocation5 + %s381]]
    %s383 = scalar_lea.vmem [#allocation9], %s382
    %v384 = vld [vmem:[%s383] sm:$0x1]
    %385 = vst [vmem:[#allocation2 + $0x36] sm:$0x1] %v384
    %s386 = sadd.s32 %s146, 6
    %s387 = sld [smem:[#allocation5 + %s386]]
    %s388 = scalar_lea.vmem [#allocation9], %s387
    %v389 = vld [vmem:[%s388] sm:$0x1]
    %390 = vst [vmem:[#allocation2 + $0x37] sm:$0x1] %v389
    %s391 = sadd.s32 %s104, 7
    %s392 = sld [smem:[#allocation5 + %s391]]
    %s393 = scalar_lea.vmem [#allocation9], %s392
    %v394 = vld [vmem:[%s393] sm:$0x1]
    %395 = vst [vmem:[#allocation2 + $0x38] sm:$0x1] %v394
    %s396 = sadd.s32 %s110, 7
    %s397 = sld [smem:[#allocation5 + %s396]]
    %s398 = scalar_lea.vmem [#allocation9], %s397
    %v399 = vld [vmem:[%s398] sm:$0x1]
    %400 = vst [vmem:[#allocation2 + $0x39] sm:$0x1] %v399
    %s401 = sadd.s32 %s116, 7
    %s402 = sld [smem:[#allocation5 + %s401]]
    %s403 = scalar_lea.vmem [#allocation9], %s402
    %v404 = vld [vmem:[%s403] sm:$0x1]
    %405 = vst [vmem:[#allocation2 + $0x3a] sm:$0x1] %v404
    %s406 = sadd.s32 %s122, 7
    %s407 = sld [smem:[#allocation5 + %s406]]
    %s408 = scalar_lea.vmem [#allocation9], %s407
    %v409 = vld [vmem:[%s408] sm:$0x1]
    %410 = vst [vmem:[#allocation2 + $0x3b] sm:$0x1] %v409
    %s411 = sadd.s32 %s128, 7
    %s412 = sld [smem:[#allocation5 + %s411]]
    %s413 = scalar_lea.vmem [#allocation9], %s412
    %v414 = vld [vmem:[%s413] sm:$0x1]
    %415 = vst [vmem:[#allocation2 + $0x3c] sm:$0x1] %v414
    %s416 = sadd.s32 %s134, 7
    %s417 = sld [smem:[#allocation5 + %s416]]
    %s418 = scalar_lea.vmem [#allocation9], %s417
    %v419 = vld [vmem:[%s418] sm:$0x1]
    %420 = vst [vmem:[#allocation2 + $0x3d] sm:$0x1] %v419
    %s421 = sadd.s32 %s140, 7
    %s422 = sld [smem:[#allocation5 + %s421]]
    %s423 = scalar_lea.vmem [#allocation9], %s422
    %v424 = vld [vmem:[%s423] sm:$0x1]
    %425 = vst [vmem:[#allocation2 + $0x3e] sm:$0x1] %v424
    %s426 = sadd.s32 %s146, 7
    %s427 = sld [smem:[#allocation5 + %s426]]
    %s428 = scalar_lea.vmem [#allocation9], %s427
    %v429 = vld [vmem:[%s428] sm:$0x1]
    %430 = vst [vmem:[#allocation2 + $0x3f] sm:$0x1] %v429
    %v431 = vld [vmem:[#allocation2] sm:$0xff]
    %v432 = vld [vmem:[#allocation2 + $0x8] sm:$0xff]
    %v433 = vld [vmem:[#allocation2 + $0x10] sm:$0xff]
    %v434 = vld [vmem:[#allocation2 + $0x18] sm:$0xff]
    %v435 = vld [vmem:[#allocation2 + $0x20] sm:$0xff]
    %v436 = vld [vmem:[#allocation2 + $0x28] sm:$0xff]
    %v437 = vld [vmem:[#allocation2 + $0x30] sm:$0xff]
    %v438 = vld [vmem:[#allocation2 + $0x38] sm:$0xff]
    %v439 = vld [vmem:[#allocation10] sm:$0xff]
    %v440 = vld [vmem:[#allocation10 + $0x8] sm:$0xff]
    %v441 = vld [vmem:[#allocation10 + $0x10] sm:$0xff]
    %v442 = vld [vmem:[#allocation10 + $0x18] sm:$0xff]
    %v443 = vld [vmem:[#allocation10 + $0x20] sm:$0xff]
    %v444 = vld [vmem:[#allocation10 + $0x28] sm:$0xff]
    %v445 = vld [vmem:[#allocation10 + $0x30] sm:$0xff]
    %v446 = vld [vmem:[#allocation10 + $0x38] sm:$0xff]
    %v447 = vld [vmem:[#allocation10 + $0x40] sm:$0xff]
    %v448 = vld [vmem:[#allocation10 + $0x48] sm:$0xff]
    %v449 = vld [vmem:[#allocation10 + $0x50] sm:$0xff]
    %v450 = vld [vmem:[#allocation10 + $0x58] sm:$0xff]
    %v451 = vld [vmem:[#allocation10 + $0x60] sm:$0xff]
    %v452 = vld [vmem:[#allocation10 + $0x68] sm:$0xff]
    %v453 = vld [vmem:[#allocation10 + $0x70] sm:$0xff]
    %v454 = vld [vmem:[#allocation10 + $0x78] sm:$0xff]
    %v455 = vld [vmem:[%s4] sm:$0x1]
    %v457 = vperm.slane %v455, 0
    %459 = vmatpush.msra.mxu0 %v454
    %460 = vmatpush.msra.mxu0 %v453
    %461 = vmatpush.msra.mxu0 %v452
    %462 = vmatpush.msra.mxu0 %v451
    %463 = vmatpush.msra.mxu0 %v450
    %464 = vmatpush.msra.mxu0 %v449
    %465 = vmatpush.msra.mxu0 %v448
    %466 = vmatpush.msra.mxu0 %v447
    %467 = vmatpush.msra.mxu0 %v446
    %468 = vmatpush.msra.mxu0 %v445
    %469 = vmatpush.msra.mxu0 %v444
    %470 = vmatpush.msra.mxu0 %v443
    %471 = vmatpush.msra.mxu0 %v442
    %472 = vmatpush.msra.mxu0 %v441
    %473 = vmatpush.msra.mxu0 %v440
    %474 = vmatpush.msra.mxu0 %v439
    %475 = vmatmul.f32.gmra.mxu0 %v431
    %v476 = vpop.f32.mrf.mxu0
    %v477 = vadd.f32 %v457, %v476
    %478 = vmatmul.f32.gmra.mxu0 %v432
    %v479 = vpop.f32.mrf.mxu0
    %v480 = vadd.f32 %v457, %v479
    %481 = vmatmul.f32.gmra.mxu0 %v433
    %v482 = vpop.f32.mrf.mxu0
    %v483 = vadd.f32 %v457, %v482
    %484 = vmatmul.f32.gmra.mxu0 %v434
    %v485 = vpop.f32.mrf.mxu0
    %v486 = vadd.f32 %v457, %v485
    %487 = vmatmul.f32.gmra.mxu0 %v435
    %v488 = vpop.f32.mrf.mxu0
    %v489 = vadd.f32 %v457, %v488
    %490 = vmatmul.f32.gmra.mxu0 %v436
    %v491 = vpop.f32.mrf.mxu0
    %v492 = vadd.f32 %v457, %v491
    %493 = vmatmul.f32.gmra.mxu0 %v437
    %v494 = vpop.f32.mrf.mxu0
    %v495 = vadd.f32 %v457, %v494
    %496 = vmatmul.f32.gmra.mxu0 %v438
    %v497 = vpop.f32.mrf.mxu0
    %v498 = vadd.f32 %v457, %v497
    %499 = vdwg.mxu0
    %500 = vst [vmem:[#allocation3] sm:$0xff] %v477
    %501 = vst [vmem:[#allocation3 + $0x8] sm:$0xff] %v480
    %502 = vst [vmem:[#allocation3 + $0x10] sm:$0xff] %v483
    %503 = vst [vmem:[#allocation3 + $0x18] sm:$0xff] %v486
    %504 = vst [vmem:[#allocation3 + $0x20] sm:$0xff] %v489
    %505 = vst [vmem:[#allocation3 + $0x28] sm:$0xff] %v492
    %506 = vst [vmem:[#allocation3 + $0x30] sm:$0xff] %v495
    %507 = vst [vmem:[#allocation3 + $0x38] sm:$0xff] %v498
    %v508 = vld [vmem:[#allocation12] sm:$0xff]
    %v509 = vld [vmem:[#allocation12 + $0x8] sm:$0xff]
    %v510 = vld [vmem:[#allocation12 + $0x10] sm:$0xff]
    %v511 = vld [vmem:[#allocation12 + $0x18] sm:$0xff]
    %v512 = vld [vmem:[#allocation3] sm:$0xff]
    %vm513 = vcmask 261120
    %v515 = vsel %vm513, 0.0, 0
    %517 = vmatpush.msra.mxu0 0.0
    %518 = vmatpush.msra.mxu0 0.0
    %519 = vmatpush.msra.mxu0 0.0
    %520 = vmatpush.msra.mxu0 0.0
    %521 = vmatpush.msra.mxu0 0.0
    %522 = vmatpush.msra.mxu0 0.0
    %523 = vmatpush.msra.mxu0 0.0
    %524 = vmatpush.msra.mxu0 0.0
    %525 = vmatpush.msra.mxu0 0.0
    %526 = vmatpush.msra.mxu0 0.0
    %527 = vmatpush.msra.mxu0 0.0
    %528 = vmatpush.msra.mxu0 0.0
    %529 = vmatpush.msra.mxu0 %v511
    %530 = vmatpush.msra.mxu0 %v510
    %531 = vmatpush.msra.mxu0 %v509
    %532 = vmatpush.msra.mxu0 %v508
    %533 = vmatmul.f32.gmra.mxu0 %v515
    %v534 = vpop.f32.mrf.mxu0
    %v535 = vadd.f32 0.0, %v534
    %536 = vdwg.mxu0
    %v537 = vadd.f32 %v512, %v535
    %v538 = vxor.u32 %v537, 2147483648
    %v539 = vmul.f32 %v538, 1.442695
    %v540 = vpow.pop %v539
    %v541 = vadd.f32 %v540, 1.0
    %v542 = vrcp.pop %v541
    %v543 = vmul.f32 %v541, %v542
    %v544 = vsub.f32 1.0, %v543
    %v545 = vmul.f32 %v542, %v544
    %v546 = vadd.f32 %v542, %v545
    %vm547 = vweird.f32 %v541
    %vm548 = vweird.f32 %v542
    %vm549 = vmor %vm547, %vm548
    %v550 = vsel %vm549, %v542, %v546
    %v551 = vand.u32 2147483647, %v541
    %vm552 = vcmp.eq.f32.partialorder %v551, 8.507059e+37
    %v553 = vand.u32 %v541, 2147483648
    %v554 = vor.u32 1.1754944e-38, %v553
    %v555 = vsel %vm552, %v554, %v550
    %v556 = vmul.f32 1.0, %v555
    %v557 = vtanh.pop %v537
    %v558 = vmul.f32 %v556, 0.0
    %560 = vrot.lane.b32.xlu0 %v557, 64
    %v561 = vpop.permute.xlu0 %560
    %v563 = vmul.f32 %v556, %v561
    %565 = vrot.lane.b32.xlu0 %v563, 32
    %v566 = vpop.permute.xlu0 %565
    %v568 = vadd.f32 %v558, %v566
    %v569 = vtanh.pop %v568
    %571 = vrot.lane.b32.xlu0 %v569, 64
    %v572 = vpop.permute.xlu0 %571
    %v574 = vmul.f32 %v556, %v572
    %576 = vrot.lane.b32.xlu0 %v574, 32
    %v577 = vpop.permute.xlu0 %576
    %579 = vst.msk [vmem:[#allocation4] sm:$0xff] %vm513, %v577
    %v580 = vld [vmem:[#allocation3 + $0x8] sm:$0xff]
    %v581 = vsel %vm513, %v577, 0
    %583 = vmatpush.msra.mxu0 0.0
    %584 = vmatpush.msra.mxu0 0.0
    %585 = vmatpush.msra.mxu0 0.0
    %586 = vmatpush.msra.mxu0 0.0
    %587 = vmatpush.msra.mxu0 0.0
    %588 = vmatpush.msra.mxu0 0.0
    %589 = vmatpush.msra.mxu0 0.0
    %590 = vmatpush.msra.mxu0 0.0
    %591 = vmatpush.msra.mxu0 0.0
    %592 = vmatpush.msra.mxu0 0.0
    %593 = vmatpush.msra.mxu0 0.0
    %594 = vmatpush.msra.mxu0 0.0
    %595 = vmatpush.msra.mxu0 %v511
    %596 = vmatpush.msra.mxu0 %v510
    %597 = vmatpush.msra.mxu0 %v509
    %598 = vmatpush.msra.mxu0 %v508
    %599 = vmatmul.f32.gmra.mxu0 %v581
    %v600 = vpop.f32.mrf.mxu0
    %v601 = vadd.f32 0.0, %v600
    %602 = vdwg.mxu0
    %v603 = vadd.f32 %v580, %v601
    %v604 = vxor.u32 %v603, 2147483648
    %v605 = vmul.f32 %v604, 1.442695
    %v606 = vpow.pop %v605
    %v607 = vadd.f32 %v606, 1.0
    %v608 = vrcp.pop %v607
    %v609 = vmul.f32 %v607, %v608
    %v610 = vsub.f32 1.0, %v609
    %v611 = vmul.f32 %v608, %v610
    %v612 = vadd.f32 %v608, %v611
    %vm613 = vweird.f32 %v607
    %vm614 = vweird.f32 %v608
    %vm615 = vmor %vm613, %vm614
    %v616 = vsel %vm615, %v608, %v612
    %v617 = vand.u32 2147483647, %v607
    %vm618 = vcmp.eq.f32.partialorder %v617, 8.507059e+37
    %v619 = vand.u32 %v607, 2147483648
    %v620 = vor.u32 1.1754944e-38, %v619
    %v621 = vsel %vm618, %v620, %v616
    %v622 = vmul.f32 1.0, %v621
    %v623 = vtanh.pop %v603
    %v624 = vmul.f32 %v622, %v568
    %626 = vrot.lane.b32.xlu0 %v623, 64
    %v627 = vpop.permute.xlu0 %626
    %v629 = vmul.f32 %v622, %v627
    %631 = vrot.lane.b32.xlu0 %v629, 32
    %v632 = vpop.permute.xlu0 %631
    %v634 = vadd.f32 %v624, %v632
    %v635 = vtanh.pop %v634
    %637 = vrot.lane.b32.xlu0 %v635, 64
    %v638 = vpop.permute.xlu0 %637
    %v640 = vmul.f32 %v622, %v638
    %642 = vrot.lane.b32.xlu0 %v640, 32
    %v643 = vpop.permute.xlu0 %642
    %645 = vst.msk [vmem:[#allocation4 + $0x8] sm:$0xff] %vm513, %v643
    %v646 = vld [vmem:[#allocation3 + $0x10] sm:$0xff]
    %v647 = vsel %vm513, %v643, 0
    %649 = vmatpush.msra.mxu0 0.0
    %650 = vmatpush.msra.mxu0 0.0
    %651 = vmatpush.msra.mxu0 0.0
    %652 = vmatpush.msra.mxu0 0.0
    %653 = vmatpush.msra.mxu0 0.0
    %654 = vmatpush.msra.mxu0 0.0
    %655 = vmatpush.msra.mxu0 0.0
    %656 = vmatpush.msra.mxu0 0.0
    %657 = vmatpush.msra.mxu0 0.0
    %658 = vmatpush.msra.mxu0 0.0
    %659 = vmatpush.msra.mxu0 0.0
    %660 = vmatpush.msra.mxu0 0.0
    %661 = vmatpush.msra.mxu0 %v511
    %662 = vmatpush.msra.mxu0 %v510
    %663 = vmatpush.msra.mxu0 %v509
    %664 = vmatpush.msra.mxu0 %v508
    %665 = vmatmul.f32.gmra.mxu0 %v647
    %v666 = vpop.f32.mrf.mxu0
    %v667 = vadd.f32 0.0, %v666
    %668 = vdwg.mxu0
    %v669 = vadd.f32 %v646, %v667
    %v670 = vxor.u32 %v669, 2147483648
    %v671 = vmul.f32 %v670, 1.442695
    %v672 = vpow.pop %v671
    %v673 = vadd.f32 %v672, 1.0
    %v674 = vrcp.pop %v673
    %v675 = vmul.f32 %v673, %v674
    %v676 = vsub.f32 1.0, %v675
    %v677 = vmul.f32 %v674, %v676
    %v678 = vadd.f32 %v674, %v677
    %vm679 = vweird.f32 %v673
    %vm680 = vweird.f32 %v674
    %vm681 = vmor %vm679, %vm680
    %v682 = vsel %vm681, %v674, %v678
    %v683 = vand.u32 2147483647, %v673
    %vm684 = vcmp.eq.f32.partialorder %v683, 8.507059e+37
    %v685 = vand.u32 %v673, 2147483648
    %v686 = vor.u32 1.1754944e-38, %v685
    %v687 = vsel %vm684, %v686, %v682
    %v688 = vmul.f32 1.0, %v687
    %v689 = vtanh.pop %v669
    %v690 = vmul.f32 %v688, %v634
    %692 = vrot.lane.b32.xlu0 %v689, 64
    %v693 = vpop.permute.xlu0 %692
    %v695 = vmul.f32 %v688, %v693
    %697 = vrot.lane.b32.xlu0 %v695, 32
    %v698 = vpop.permute.xlu0 %697
    %v700 = vadd.f32 %v690, %v698
    %v701 = vtanh.pop %v700
    %703 = vrot.lane.b32.xlu0 %v701, 64
    %v704 = vpop.permute.xlu0 %703
    %v706 = vmul.f32 %v688, %v704
    %708 = vrot.lane.b32.xlu0 %v706, 32
    %v709 = vpop.permute.xlu0 %708
    %711 = vst.msk [vmem:[#allocation4 + $0x10] sm:$0xff] %vm513, %v709
    %v712 = vld [vmem:[#allocation3 + $0x18] sm:$0xff]
    %v713 = vsel %vm513, %v709, 0
    %715 = vmatpush.msra.mxu0 0.0
    %716 = vmatpush.msra.mxu0 0.0
    %717 = vmatpush.msra.mxu0 0.0
    %718 = vmatpush.msra.mxu0 0.0
    %719 = vmatpush.msra.mxu0 0.0
    %720 = vmatpush.msra.mxu0 0.0
    %721 = vmatpush.msra.mxu0 0.0
    %722 = vmatpush.msra.mxu0 0.0
    %723 = vmatpush.msra.mxu0 0.0
    %724 = vmatpush.msra.mxu0 0.0
    %725 = vmatpush.msra.mxu0 0.0
    %726 = vmatpush.msra.mxu0 0.0
    %727 = vmatpush.msra.mxu0 %v511
    %728 = vmatpush.msra.mxu0 %v510
    %729 = vmatpush.msra.mxu0 %v509
    %730 = vmatpush.msra.mxu0 %v508
    %731 = vmatmul.f32.gmra.mxu0 %v713
    %v732 = vpop.f32.mrf.mxu0
    %v733 = vadd.f32 0.0, %v732
    %734 = vdwg.mxu0
    %v735 = vadd.f32 %v712, %v733
    %v736 = vxor.u32 %v735, 2147483648
    %v737 = vmul.f32 %v736, 1.442695
    %v738 = vpow.pop %v737
    %v739 = vadd.f32 %v738, 1.0
    %v740 = vrcp.pop %v739
    %v741 = vmul.f32 %v739, %v740
    %v742 = vsub.f32 1.0, %v741
    %v743 = vmul.f32 %v740, %v742
    %v744 = vadd.f32 %v740, %v743
    %vm745 = vweird.f32 %v739
    %vm746 = vweird.f32 %v740
    %vm747 = vmor %vm745, %vm746
    %v748 = vsel %vm747, %v740, %v744
    %v749 = vand.u32 2147483647, %v739
    %vm750 = vcmp.eq.f32.partialorder %v749, 8.507059e+37
    %v751 = vand.u32 %v739, 2147483648
    %v752 = vor.u32 1.1754944e-38, %v751
    %v753 = vsel %vm750, %v752, %v748
    %v754 = vmul.f32 1.0, %v753
    %v755 = vtanh.pop %v735
    %v756 = vmul.f32 %v754, %v700
    %758 = vrot.lane.b32.xlu0 %v755, 64
    %v759 = vpop.permute.xlu0 %758
    %v761 = vmul.f32 %v754, %v759
    %763 = vrot.lane.b32.xlu0 %v761, 32
    %v764 = vpop.permute.xlu0 %763
    %v766 = vadd.f32 %v756, %v764
    %v767 = vtanh.pop %v766
    %769 = vrot.lane.b32.xlu0 %v767, 64
    %v770 = vpop.permute.xlu0 %769
    %v772 = vmul.f32 %v754, %v770
    %774 = vrot.lane.b32.xlu0 %v772, 32
    %v775 = vpop.permute.xlu0 %774
    %777 = vst.msk [vmem:[#allocation4 + $0x18] sm:$0xff] %vm513, %v775
    %v778 = vld [vmem:[#allocation3 + $0x20] sm:$0xff]
    %v779 = vsel %vm513, %v775, 0
    %781 = vmatpush.msra.mxu0 0.0
    %782 = vmatpush.msra.mxu0 0.0
    %783 = vmatpush.msra.mxu0 0.0
    %784 = vmatpush.msra.mxu0 0.0
    %785 = vmatpush.msra.mxu0 0.0
    %786 = vmatpush.msra.mxu0 0.0
    %787 = vmatpush.msra.mxu0 0.0
    %788 = vmatpush.msra.mxu0 0.0
    %789 = vmatpush.msra.mxu0 0.0
    %790 = vmatpush.msra.mxu0 0.0
    %791 = vmatpush.msra.mxu0 0.0
    %792 = vmatpush.msra.mxu0 0.0
    %793 = vmatpush.msra.mxu0 %v511
    %794 = vmatpush.msra.mxu0 %v510
    %795 = vmatpush.msra.mxu0 %v509
    %796 = vmatpush.msra.mxu0 %v508
    %797 = vmatmul.f32.gmra.mxu0 %v779
    %v798 = vpop.f32.mrf.mxu0
    %v799 = vadd.f32 0.0, %v798
    %800 = vdwg.mxu0
    %v801 = vadd.f32 %v778, %v799
    %v802 = vxor.u32 %v801, 2147483648
    %v803 = vmul.f32 %v802, 1.442695
    %v804 = vpow.pop %v803
    %v805 = vadd.f32 %v804, 1.0
    %v806 = vrcp.pop %v805
    %v807 = vmul.f32 %v805, %v806
    %v808 = vsub.f32 1.0, %v807
    %v809 = vmul.f32 %v806, %v808
    %v810 = vadd.f32 %v806, %v809
    %vm811 = vweird.f32 %v805
    %vm812 = vweird.f32 %v806
    %vm813 = vmor %vm811, %vm812
    %v814 = vsel %vm813, %v806, %v810
    %v815 = vand.u32 2147483647, %v805
    %vm816 = vcmp.eq.f32.partialorder %v815, 8.507059e+37
    %v817 = vand.u32 %v805, 2147483648
    %v818 = vor.u32 1.1754944e-38, %v817
    %v819 = vsel %vm816, %v818, %v814
    %v820 = vmul.f32 1.0, %v819
    %v821 = vtanh.pop %v801
    %v822 = vmul.f32 %v820, %v766
    %824 = vrot.lane.b32.xlu0 %v821, 64
    %v825 = vpop.permute.xlu0 %824
    %v827 = vmul.f32 %v820, %v825
    %829 = vrot.lane.b32.xlu0 %v827, 32
    %v830 = vpop.permute.xlu0 %829
    %v832 = vadd.f32 %v822, %v830
    %v833 = vtanh.pop %v832
    %835 = vrot.lane.b32.xlu0 %v833, 64
    %v836 = vpop.permute.xlu0 %835
    %v838 = vmul.f32 %v820, %v836
    %840 = vrot.lane.b32.xlu0 %v838, 32
    %v841 = vpop.permute.xlu0 %840
    %843 = vst.msk [vmem:[#allocation4 + $0x20] sm:$0xff] %vm513, %v841
    %v844 = vld [vmem:[#allocation3 + $0x28] sm:$0xff]
    %v845 = vsel %vm513, %v841, 0
    %847 = vmatpush.msra.mxu0 0.0
    %848 = vmatpush.msra.mxu0 0.0
    %849 = vmatpush.msra.mxu0 0.0
    %850 = vmatpush.msra.mxu0 0.0
    %851 = vmatpush.msra.mxu0 0.0
    %852 = vmatpush.msra.mxu0 0.0
    %853 = vmatpush.msra.mxu0 0.0
    %854 = vmatpush.msra.mxu0 0.0
    %855 = vmatpush.msra.mxu0 0.0
    %856 = vmatpush.msra.mxu0 0.0
    %857 = vmatpush.msra.mxu0 0.0
    %858 = vmatpush.msra.mxu0 0.0
    %859 = vmatpush.msra.mxu0 %v511
    %860 = vmatpush.msra.mxu0 %v510
    %861 = vmatpush.msra.mxu0 %v509
    %862 = vmatpush.msra.mxu0 %v508
    %863 = vmatmul.f32.gmra.mxu0 %v845
    %v864 = vpop.f32.mrf.mxu0
    %v865 = vadd.f32 0.0, %v864
    %866 = vdwg.mxu0
    %v867 = vadd.f32 %v844, %v865
    %v868 = vxor.u32 %v867, 2147483648
    %v869 = vmul.f32 %v868, 1.442695
    %v870 = vpow.pop %v869
    %v871 = vadd.f32 %v870, 1.0
    %v872 = vrcp.pop %v871
    %v873 = vmul.f32 %v871, %v872
    %v874 = vsub.f32 1.0, %v873
    %v875 = vmul.f32 %v872, %v874
    %v876 = vadd.f32 %v872, %v875
    %vm877 = vweird.f32 %v871
    %vm878 = vweird.f32 %v872
    %vm879 = vmor %vm877, %vm878
    %v880 = vsel %vm879, %v872, %v876
    %v881 = vand.u32 2147483647, %v871
    %vm882 = vcmp.eq.f32.partialorder %v881, 8.507059e+37
    %v883 = vand.u32 %v871, 2147483648
    %v884 = vor.u32 1.1754944e-38, %v883
    %v885 = vsel %vm882, %v884, %v880
    %v886 = vmul.f32 1.0, %v885
    %v887 = vtanh.pop %v867
    %v888 = vmul.f32 %v886, %v832
    %890 = vrot.lane.b32.xlu0 %v887, 64
    %v891 = vpop.permute.xlu0 %890
    %v893 = vmul.f32 %v886, %v891
    %895 = vrot.lane.b32.xlu0 %v893, 32
    %v896 = vpop.permute.xlu0 %895
    %v898 = vadd.f32 %v888, %v896
    %v899 = vtanh.pop %v898
    %901 = vrot.lane.b32.xlu0 %v899, 64
    %v902 = vpop.permute.xlu0 %901
    %v904 = vmul.f32 %v886, %v902
    %906 = vrot.lane.b32.xlu0 %v904, 32
    %v907 = vpop.permute.xlu0 %906
    %909 = vst.msk [vmem:[#allocation4 + $0x28] sm:$0xff] %vm513, %v907
    %v910 = vld [vmem:[#allocation3 + $0x30] sm:$0xff]
    %v911 = vsel %vm513, %v907, 0
    %913 = vmatpush.msra.mxu0 0.0
    %914 = vmatpush.msra.mxu0 0.0
    %915 = vmatpush.msra.mxu0 0.0
    %916 = vmatpush.msra.mxu0 0.0
    %917 = vmatpush.msra.mxu0 0.0
    %918 = vmatpush.msra.mxu0 0.0
    %919 = vmatpush.msra.mxu0 0.0
    %920 = vmatpush.msra.mxu0 0.0
    %921 = vmatpush.msra.mxu0 0.0
    %922 = vmatpush.msra.mxu0 0.0
    %923 = vmatpush.msra.mxu0 0.0
    %924 = vmatpush.msra.mxu0 0.0
    %925 = vmatpush.msra.mxu0 %v511
    %926 = vmatpush.msra.mxu0 %v510
    %927 = vmatpush.msra.mxu0 %v509
    %928 = vmatpush.msra.mxu0 %v508
    %929 = vmatmul.f32.gmra.mxu0 %v911
    %v930 = vpop.f32.mrf.mxu0
    %v931 = vadd.f32 0.0, %v930
    %932 = vdwg.mxu0
    %v933 = vadd.f32 %v910, %v931
    %v934 = vxor.u32 %v933, 2147483648
    %v935 = vmul.f32 %v934, 1.442695
    %v936 = vpow.pop %v935
    %v937 = vadd.f32 %v936, 1.0
    %v938 = vrcp.pop %v937
    %v939 = vmul.f32 %v937, %v938
    %v940 = vsub.f32 1.0, %v939
    %v941 = vmul.f32 %v938, %v940
    %v942 = vadd.f32 %v938, %v941
    %vm943 = vweird.f32 %v937
    %vm944 = vweird.f32 %v938
    %vm945 = vmor %vm943, %vm944
    %v946 = vsel %vm945, %v938, %v942
    %v947 = vand.u32 2147483647, %v937
    %vm948 = vcmp.eq.f32.partialorder %v947, 8.507059e+37
    %v949 = vand.u32 %v937, 2147483648
    %v950 = vor.u32 1.1754944e-38, %v949
    %v951 = vsel %vm948, %v950, %v946
    %v952 = vmul.f32 1.0, %v951
    %v953 = vtanh.pop %v933
    %v954 = vmul.f32 %v952, %v898
    %956 = vrot.lane.b32.xlu0 %v953, 64
    %v957 = vpop.permute.xlu0 %956
    %v959 = vmul.f32 %v952, %v957
    %961 = vrot.lane.b32.xlu0 %v959, 32
    %v962 = vpop.permute.xlu0 %961
    %v964 = vadd.f32 %v954, %v962
    %v965 = vtanh.pop %v964
    %967 = vrot.lane.b32.xlu0 %v965, 64
    %v968 = vpop.permute.xlu0 %967
    %v970 = vmul.f32 %v952, %v968
    %972 = vrot.lane.b32.xlu0 %v970, 32
    %v973 = vpop.permute.xlu0 %972
    %975 = vst.msk [vmem:[#allocation4 + $0x30] sm:$0xff] %vm513, %v973
    %v976 = vld [vmem:[#allocation3 + $0x38] sm:$0xff]
    %v977 = vsel %vm513, %v973, 0
    %979 = vmatpush.msra.mxu0 0.0
    %980 = vmatpush.msra.mxu0 0.0
    %981 = vmatpush.msra.mxu0 0.0
    %982 = vmatpush.msra.mxu0 0.0
    %983 = vmatpush.msra.mxu0 0.0
    %984 = vmatpush.msra.mxu0 0.0
    %985 = vmatpush.msra.mxu0 0.0
    %986 = vmatpush.msra.mxu0 0.0
    %987 = vmatpush.msra.mxu0 0.0
    %988 = vmatpush.msra.mxu0 0.0
    %989 = vmatpush.msra.mxu0 0.0
    %990 = vmatpush.msra.mxu0 0.0
    %991 = vmatpush.msra.mxu0 %v511
    %992 = vmatpush.msra.mxu0 %v510
    %993 = vmatpush.msra.mxu0 %v509
    %994 = vmatpush.msra.mxu0 %v508
    %995 = vmatmul.f32.gmra.mxu0 %v977
    %v996 = vpop.f32.mrf.mxu0
    %v997 = vadd.f32 0.0, %v996
    %998 = vdwg.mxu0
    %v999 = vadd.f32 %v976, %v997
    %v1000 = vxor.u32 %v999, 2147483648
    %v1001 = vmul.f32 %v1000, 1.442695
    %v1002 = vpow.pop %v1001
    %v1003 = vadd.f32 %v1002, 1.0
    %v1004 = vrcp.pop %v1003
    %v1005 = vmul.f32 %v1003, %v1004
    %v1006 = vsub.f32 1.0, %v1005
    %v1007 = vmul.f32 %v1004, %v1006
    %v1008 = vadd.f32 %v1004, %v1007
    %vm1009 = vweird.f32 %v1003
    %vm1010 = vweird.f32 %v1004
    %vm1011 = vmor %vm1009, %vm1010
    %v1012 = vsel %vm1011, %v1004, %v1008
    %v1013 = vand.u32 2147483647, %v1003
    %vm1014 = vcmp.eq.f32.partialorder %v1013, 8.507059e+37
    %v1015 = vand.u32 %v1003, 2147483648
    %v1016 = vor.u32 1.1754944e-38, %v1015
    %v1017 = vsel %vm1014, %v1016, %v1012
    %v1018 = vmul.f32 1.0, %v1017
    %v1019 = vtanh.pop %v999
    %v1020 = vmul.f32 %v1018, %v964
    %1022 = vrot.lane.b32.xlu0 %v1019, 64
    %v1023 = vpop.permute.xlu0 %1022
    %v1025 = vmul.f32 %v1018, %v1023
    %1027 = vrot.lane.b32.xlu0 %v1025, 32
    %v1028 = vpop.permute.xlu0 %1027
    %v1030 = vadd.f32 %v1020, %v1028
    %v1031 = vtanh.pop %v1030
    %1033 = vrot.lane.b32.xlu0 %v1031, 64
    %v1034 = vpop.permute.xlu0 %1033
    %v1036 = vmul.f32 %v1018, %v1034
    %1038 = vrot.lane.b32.xlu0 %v1036, 32
    %v1039 = vpop.permute.xlu0 %1038
    %1041 = vst.msk [vmem:[#allocation4 + $0x38] sm:$0xff] %vm513, %v1039
    %v1042 = vld [vmem:[#allocation4] sm:$0xff]
    %v1043 = vld [vmem:[#allocation4 + $0x8] sm:$0xff]
    %v1044 = vld [vmem:[#allocation4 + $0x10] sm:$0xff]
    %v1045 = vld [vmem:[#allocation4 + $0x18] sm:$0xff]
    %v1046 = vld [vmem:[#allocation4 + $0x20] sm:$0xff]
    %v1047 = vld [vmem:[#allocation4 + $0x28] sm:$0xff]
    %v1048 = vld [vmem:[#allocation4 + $0x30] sm:$0xff]
    %v1049 = vld [vmem:[#allocation4 + $0x38] sm:$0xff]
    %v1050 = vld [vmem:[#allocation13] sm:$0xff]
    %v1051 = vld [vmem:[#allocation13 + $0x8] sm:$0xff]
    %v1052 = vld [vmem:[#allocation13 + $0x10] sm:$0xff]
    %v1053 = vld [vmem:[#allocation13 + $0x18] sm:$0xff]
    %v1054 = vld [vmem:[%s6] sm:$0x1]
    %v1056 = vperm.slane %v1054, 0
    %v1059 = vsel %vm513, %v1042, 0
    %v1062 = vsel %vm513, %v1043, 0
    %v1065 = vsel %vm513, %v1044, 0
    %v1068 = vsel %vm513, %v1045, 0
    %v1071 = vsel %vm513, %v1046, 0
    %v1074 = vsel %vm513, %v1047, 0
    %v1077 = vsel %vm513, %v1048, 0
    %v1080 = vsel %vm513, %v1049, 0
    %1082 = vmatpush.msra.mxu0 0.0
    %1083 = vmatpush.msra.mxu0 0.0
    %1084 = vmatpush.msra.mxu0 0.0
    %1085 = vmatpush.msra.mxu0 0.0
    %1086 = vmatpush.msra.mxu0 0.0
    %1087 = vmatpush.msra.mxu0 0.0
    %1088 = vmatpush.msra.mxu0 0.0
    %1089 = vmatpush.msra.mxu0 0.0
    %1090 = vmatpush.msra.mxu0 0.0
    %1091 = vmatpush.msra.mxu0 0.0
    %1092 = vmatpush.msra.mxu0 0.0
    %1093 = vmatpush.msra.mxu0 0.0
    %1094 = vmatpush.msra.mxu0 %v1053
    %1095 = vmatpush.msra.mxu0 %v1052
    %1096 = vmatpush.msra.mxu0 %v1051
    %1097 = vmatpush.msra.mxu0 %v1050
    %1098 = vmatmul.f32.gmra.mxu0 %v1059
    %v1099 = vpop.f32.mrf.mxu0
    %v1100 = vadd.f32 %v1056, %v1099
    %1101 = vmatmul.f32.gmra.mxu0 %v1062
    %v1102 = vpop.f32.mrf.mxu0
    %v1103 = vadd.f32 %v1056, %v1102
    %1104 = vmatmul.f32.gmra.mxu0 %v1065
    %v1105 = vpop.f32.mrf.mxu0
    %v1106 = vadd.f32 %v1056, %v1105
    %1107 = vmatmul.f32.gmra.mxu0 %v1068
    %v1108 = vpop.f32.mrf.mxu0
    %v1109 = vadd.f32 %v1056, %v1108
    %1110 = vmatmul.f32.gmra.mxu0 %v1071
    %v1111 = vpop.f32.mrf.mxu0
    %v1112 = vadd.f32 %v1056, %v1111
    %1113 = vmatmul.f32.gmra.mxu0 %v1074
    %v1114 = vpop.f32.mrf.mxu0
    %v1115 = vadd.f32 %v1056, %v1114
    %1116 = vmatmul.f32.gmra.mxu0 %v1077
    %v1117 = vpop.f32.mrf.mxu0
    %v1118 = vadd.f32 %v1056, %v1117
    %1119 = vmatmul.f32.gmra.mxu0 %v1080
    %v1120 = vpop.f32.mrf.mxu0
    %v1121 = vadd.f32 %v1056, %v1120
    %1122 = vdwg.mxu0
    %1123 = vmax.xlane.f32.xlu0 %v1100
    %v1124 = vpop.xlane.xlu0 %1123
    %1125 = vmax.xlane.f32.xlu0 %v1103
    %v1126 = vpop.xlane.xlu0 %1125
    %1127 = vmax.xlane.f32.xlu0 %v1106
    %v1128 = vpop.xlane.xlu0 %1127
    %1129 = vmax.xlane.f32.xlu0 %v1109
    %v1130 = vpop.xlane.xlu0 %1129
    %1131 = vmax.xlane.f32.xlu0 %v1112
    %v1132 = vpop.xlane.xlu0 %1131
    %1133 = vmax.xlane.f32.xlu0 %v1115
    %v1134 = vpop.xlane.xlu0 %1133
    %1135 = vmax.xlane.f32.xlu0 %v1118
    %v1136 = vpop.xlane.xlu0 %1135
    %1137 = vmax.xlane.f32.xlu0 %v1121
    %v1138 = vpop.xlane.xlu0 %1137
    %v1139 = vsub.f32 %v1100, %v1124
    %v1140 = vsub.f32 %v1103, %v1126
    %v1141 = vsub.f32 %v1106, %v1128
    %v1142 = vsub.f32 %v1109, %v1130
    %v1143 = vsub.f32 %v1112, %v1132
    %v1144 = vsub.f32 %v1115, %v1134
    %v1145 = vsub.f32 %v1118, %v1136
    %v1146 = vsub.f32 %v1121, %v1138
    %v1147 = vmul.f32 %v1139, 1.442695
    %v1148 = vpow.pop %v1147
    %v1149 = vmul.f32 %v1140, 1.442695
    %v1150 = vpow.pop %v1149
    %v1151 = vmul.f32 %v1141, 1.442695
    %v1152 = vpow.pop %v1151
    %v1153 = vmul.f32 %v1142, 1.442695
    %v1154 = vpow.pop %v1153
    %v1155 = vmul.f32 %v1143, 1.442695
    %v1156 = vpow.pop %v1155
    %v1157 = vmul.f32 %v1144, 1.442695
    %v1158 = vpow.pop %v1157
    %v1159 = vmul.f32 %v1145, 1.442695
    %v1160 = vpow.pop %v1159
    %v1161 = vmul.f32 %v1146, 1.442695
    %v1162 = vpow.pop %v1161
    %1163 = vadd.xlane.f32.xlu0 %v1148
    %v1164 = vpop.xlane.xlu0 %1163
    %1165 = vadd.xlane.f32.xlu0 %v1150
    %v1166 = vpop.xlane.xlu0 %1165
    %1167 = vadd.xlane.f32.xlu0 %v1152
    %v1168 = vpop.xlane.xlu0 %1167
    %1169 = vadd.xlane.f32.xlu0 %v1154
    %v1170 = vpop.xlane.xlu0 %1169
    %1171 = vadd.xlane.f32.xlu0 %v1156
    %v1172 = vpop.xlane.xlu0 %1171
    %1173 = vadd.xlane.f32.xlu0 %v1158
    %v1174 = vpop.xlane.xlu0 %1173
    %1175 = vadd.xlane.f32.xlu0 %v1160
    %v1176 = vpop.xlane.xlu0 %1175
    %1177 = vadd.xlane.f32.xlu0 %v1162
    %v1178 = vpop.xlane.xlu0 %1177
    %v1179 = vlog2.pop %v1164
    %v1180 = vmul.f32 %v1179, 0.6931472
    %v1181 = vlog2.pop %v1166
    %v1182 = vmul.f32 %v1181, 0.6931472
    %v1183 = vlog2.pop %v1168
    %v1184 = vmul.f32 %v1183, 0.6931472
    %v1185 = vlog2.pop %v1170
    %v1186 = vmul.f32 %v1185, 0.6931472
    %v1187 = vlog2.pop %v1172
    %v1188 = vmul.f32 %v1187, 0.6931472
    %v1189 = vlog2.pop %v1174
    %v1190 = vmul.f32 %v1189, 0.6931472
    %v1191 = vlog2.pop %v1176
    %v1192 = vmul.f32 %v1191, 0.6931472
    %v1193 = vlog2.pop %v1178
    %v1194 = vmul.f32 %v1193, 0.6931472
    %v1195 = vsub.f32 %v1139, %v1180
    %v1196 = vsub.f32 %v1140, %v1182
    %v1197 = vsub.f32 %v1141, %v1184
    %v1198 = vsub.f32 %v1142, %v1186
    %v1199 = vsub.f32 %v1143, %v1188
    %v1200 = vsub.f32 %v1144, %v1190
    %v1201 = vsub.f32 %v1145, %v1192
    %v1202 = vsub.f32 %v1146, %v1194
    %1203 = vst [vmem:[#allocation15] sm:$0xff] %v1195
    %1204 = vst [vmem:[#allocation15 + $0x8] sm:$0xff] %v1196
    %1205 = vst [vmem:[#allocation15 + $0x10] sm:$0xff] %v1197
    %1206 = vst [vmem:[#allocation15 + $0x18] sm:$0xff] %v1198
    %1207 = vst [vmem:[#allocation15 + $0x20] sm:$0xff] %v1199
    %1208 = vst [vmem:[#allocation15 + $0x28] sm:$0xff] %v1200
    %1209 = vst [vmem:[#allocation15 + $0x30] sm:$0xff] %v1201
    %1210 = vst [vmem:[#allocation15 + $0x38] sm:$0xff] %v1202
    // Predicated region
    $region50: #{tpu_custom_call.1} parent=1 // pred_check
      _
    $region51: #{tpu_custom_call.1} parent=1 // pred_check_branch
      %1212 = sbr.rel (0) target = $region53
    $region52: #{tpu_custom_call.1} parent=1 // pred_region
      %1214 = vsyncadd [#allocation7], 0
      %s1215 = sshll.u32 [#allocation15], 4
      %s1216 = int_to_ptr.vmem [resolvable:$true] %s1215
      %s1217 = sshll.u32 %s7, 4
      %s1218 = int_to_ptr.hbm [resolvable:$true] %s1217
      %1223 = dma.vmem_to_hbm [thread:$0]  %s1216, 1024, %s1218, [#allocation7], 128, 128, 8
    $region53: #{tpu_custom_call.1} parent=1 // pred_fallthru
      _
    // Predicated region
    $region54: #{tpu_custom_call.1} parent=1 // pred_check
      _
    $region55: #{tpu_custom_call.1} parent=1 // pred_check_branch
      %1225 = sbr.rel (0) target = $region57
    $region56: #{tpu_custom_call.1} parent=1 // pred_region
      %1227 = dma.done [#allocation7], 1024
    $region57: #{tpu_custom_call.1} parent=1 // pred_fallthru
      _
    %1228 = vsyncpa [#allocation6], 1
    %1229 = vsyncpa [#allocation11], 1
    %1230 = vsyncpa [#allocation14], 1
    %1231 = vsyncpa [#allocation7], 1
    %1232 = vsyncpa [#allocation8], 1

</llo_original>
